<compile_context>
chip_gen: v7x
topology: tpu7x:2x2x1
jax: 0.10.0
libtpu: 0.0.40
codegen_flags: <defaults>
</compile_context>

<pallas_src>
import numpy as np

import jax
import jax.numpy as jnp
from jax.experimental import pallas as pl
from jax.experimental.pallas import tpu as pltpu

_EPS = 1e-5


def _round_up(x, m):
    return (x + m - 1) // m * m


# ---------------------------------------------------------------------------
# Fused whole-network kernel (one batch tile per grid step)
# ---------------------------------------------------------------------------
def _lenet_kernel(xb_ref,     # (24*TB, 140) bf16  conv1 band rows (row = oh*TB + b)
                  w1_ref,     # (140, 256)   bf16  conv1 banded weight (BN scale folded in)
                  b1_ref,     # (1, 256)     f32   conv1+BN bias (packed columns)
                  w2_ref,     # (640, 256)   bf16  conv2 banded weight (BN scale folded in)
                  b2_ref,     # (1, 256)     f32
                  wf1_ref,    # (512, 128)   bf16  fc1 weight (NCHW flatten order folded in)
                  bf1_ref,    # (1, 128)     f32
                  wf2_ref,    # (128, 128)   bf16  fc2 weight (lane-padded)
                  bf2_ref,    # (1, 128)     f32
                  o_ref,      # (TB, 128)    f32   logits (cols >= 10 are zero padding)
                  a1_ref,     # (24*TB, 256) bf16  conv1+BN rows, even/odd ow in 128-halves
                  a2_ref,     # (TB, 1536)   bf16  pool1+ReLU slab, row ph at lanes [128*ph,+128)
                  bnd2_ref,   # (8*TB, 640)  bf16  conv2 band rows (row = oh*TB + b)
                  a3_ref):    # (8*TB, 256)  bf16  conv2+BN rows, even/odd ow in 128-halves
    f32 = jnp.float32
    bf16 = jnp.bfloat16
    TB = o_ref.shape[0]

    # conv1 (5x5, 1->10) + BatchNorm: ONE long-M MXU matmul, bias added once.
    z1 = jnp.dot(xb_ref[...], w1_ref[...], preferred_element_type=f32)       # (24*TB, 256)
    a1_ref[...] = (z1 + b1_ref[...]).astype(bf16)

    # 2x2 max-pool + ReLU: row-pair max (sublane-aligned TB slices), then max of the
    # even/odd 128-lane halves; each pooled row lands in its own 128-aligned lane group.
    for ph in range(12):
        m = jnp.maximum(a1_ref[pl.ds(2 * ph * TB, TB), :],
                        a1_ref[pl.ds((2 * ph + 1) * TB, TB), :])              # (TB, 256)
        m = jnp.maximum(m[:, :128], m[:, 128:])                               # (TB, 128)
        a2_ref[:, pl.ds(128 * ph, 128)] = jnp.maximum(m, 0.0)

    # conv2 band: 8 lane-aligned 640-wide slices of a2 stacked along sublanes (no concat,
    # no casts -- a2 is already bf16).
    for oh in range(8):
        bnd2_ref[pl.ds(oh * TB, TB), :] = a2_ref[:, pl.ds(128 * oh, 640)]

    # conv2 (5x5, 10->20) + BatchNorm (Dropout2d is identity in eval mode): ONE matmul.
    z2 = jnp.dot(bnd2_ref[...], w2_ref[...], preferred_element_type=f32)      # (8*TB, 256)
    a3_ref[...] = (z2 + b2_ref[...]).astype(bf16)

    # 2x2 max-pool + ReLU, flatten (NCHW order folded into wf1), fc1+ReLU, fc2.
    rows = []
    for ph in range(4):
        m = jnp.maximum(a3_ref[pl.ds(2 * ph * TB, TB), :],
                        a3_ref[pl.ds((2 * ph + 1) * TB, TB), :])              # (TB, 256)
        m = jnp.maximum(m[:, :128], m[:, 128:])                               # (TB, 128)
        rows.append(jnp.maximum(m, 0.0))
    flat = jnp.concatenate(rows, axis=-1)                                     # (TB, 512) bf16
    h1 = jnp.dot(flat, wf1_ref[...], preferred_element_type=f32) + bf1_ref[...]
    h1 = jnp.maximum(h1, 0.0)                                                 # cols>=50 stay 0
    # F.dropout: identity in eval mode.
    o_ref[...] = jnp.dot(h1.astype(bf16), wf2_ref[...],
                         preferred_element_type=f32) + bf2_ref[...]


# ---------------------------------------------------------------------------
# Host-side weight packing (one time): fold BN into weights/bias, build banded conv
# matrices with even/odd output-column interleave, fold the NCHW flatten into fc1,
# lane-pad fc2 to a 128-wide output.
# ---------------------------------------------------------------------------
def pack_params(params):
    p = {k: np.asarray(v, np.float32) for k, v in params.items()}

    s1 = p["bn1_g"] / np.sqrt(p["bn1_v"] + _EPS)
    t1 = p["bn1_b"] + s1 * (p["conv1_b"] - p["bn1_m"])
    w1e = p["conv1_w"][:, 0] * s1[:, None, None]                    # (10, 5, 5)
    s2 = p["bn2_g"] / np.sqrt(p["bn2_v"] + _EPS)
    t2 = p["bn2_b"] + s2 * (p["conv2_b"] - p["bn2_m"])
    w2e = p["conv2_w"] * s2[:, None, None, None]                    # (20, 10, 5, 5)

    # conv1: input feature f = kh*28 + iw ; output col = (ow%2)*128 + (ow//2)*10 + co.
    W1 = np.zeros((140, 256), np.float32)
    B1 = np.zeros((1, 256), np.float32)
    for ow in range(24):
        for co in range(10):
            col = (ow % 2) * 128 + (ow // 2) * 10 + co
            B1[0, col] = t1[co]
            for kh in range(5):
                for kw in range(5):
                    W1[kh * 28 + ow + kw, col] = w1e[co, kh, kw]

    # conv2: input feature f = kh*128 + iw*10 + ci ; output col = (ow%2)*128 + (ow//2)*20 + co.
    W2 = np.zeros((640, 256), np.float32)
    B2 = np.zeros((1, 256), np.float32)
    for ow in range(8):
        for co in range(20):
            col = (ow % 2) * 128 + (ow // 2) * 20 + co
            B2[0, col] = t2[co]
            for kh in range(5):
                for kw in range(5):
                    for ci in range(10):
                        W2[kh * 128 + (ow + kw) * 10 + ci, col] = w2e[co, ci, kh, kw]

    # fc1: kernel feature g = ph*128 + q*20 + co  <->  PyTorch flatten index co*16 + ph*4 + q.
    Wf1 = np.zeros((512, 128), np.float32)
    Bf1 = np.zeros((1, 128), np.float32)
    Bf1[0, :50] = p["fc1_b"]
    for ph in range(4):
        for q in range(4):
            for co in range(20):
                Wf1[ph * 128 + q * 20 + co, :50] = p["fc1_w"][:, co * 16 + ph * 4 + q]

    # fc2: lane-pad to 128 output columns for an unmasked, contiguous writeback.
    Wf2 = np.zeros((128, 128), np.float32)
    Wf2[:50, :10] = p["fc2_w"].T
    Bf2 = np.zeros((1, 128), np.float32)
    Bf2[0, :10] = p["fc2_b"]

    bf16 = jnp.bfloat16
    return (jnp.asarray(W1, bf16), jnp.asarray(B1),
            jnp.asarray(W2, bf16), jnp.asarray(B2),
            jnp.asarray(Wf1, bf16), jnp.asarray(Bf1),
            jnp.asarray(Wf2, bf16), jnp.asarray(Bf2))


# ---------------------------------------------------------------------------
# Batch tile choice: cap at 256 (fits v7x's 64 MiB VMEM with headroom), and for larger
# batches pick a tile that gives >= 2 grid steps so "parallel" shards across TensorCores.
# ---------------------------------------------------------------------------
def _choose_tile(B):
    full = _round_up(B, 16)
    if full <= 32:
        return full
    return min(256, _round_up((full + 1) // 2, 16))


# ---------------------------------------------------------------------------
# Forward pass
# ---------------------------------------------------------------------------
@jax.jit
def forward(x_nchw, packed):
    assert x_nchw.shape[1:] == (1, 28, 28), "expected (B, 1, 28, 28) input"
    B = x_nchw.shape[0]
    TB = _choose_tile(B)
    Bp = _round_up(B, TB)
    ntiles = Bp // TB
    W1, B1, W2, B2, Wf1, Bf1, Wf2, Bf2 = packed

    # Build the conv1 row band in one fused gather/reshape/transpose/cast pass:
    # band row ((tile*24 + oh)*TB + b_local, f) = x[b, oh + f//28, f%28], f = kh*28 + iw.
    x = x_nchw.reshape(B, 28, 28)
    if Bp != B:
        x = jnp.pad(x, ((0, Bp - B), (0, 0), (0, 0)))
    win = jnp.arange(24)[:, None] + jnp.arange(5)[None, :]           # (24, 5)
    band = x[:, win, :].astype(jnp.bfloat16)                         # (Bp, 24, 5, 28)
    band = band.reshape(ntiles, TB, 24, 140)
    band = jnp.transpose(band, (0, 2, 1, 3)).reshape(Bp * 24, 140)   # (ntiles*24*TB, 140)

    out = pl.pallas_call(
        _lenet_kernel,
        out_shape=jax.ShapeDtypeStruct((Bp, 128), jnp.float32),
        grid_spec=pltpu.PrefetchScalarGridSpec(
            num_scalar_prefetch=0,
            grid=(ntiles,),
            in_specs=[
                pl.BlockSpec((24 * TB, 140), lambda i: (i, 0)),       # conv1 band (varies)
                pl.BlockSpec((140, 256), lambda i: (0, 0)),           # weights: VMEM-resident
                pl.BlockSpec((1, 256), lambda i: (0, 0)),
                pl.BlockSpec((640, 256), lambda i: (0, 0)),
                pl.BlockSpec((1, 256), lambda i: (0, 0)),
                pl.BlockSpec((512, 128), lambda i: (0, 0)),
                pl.BlockSpec((1, 128), lambda i: (0, 0)),
                pl.BlockSpec((128, 128), lambda i: (0, 0)),
                pl.BlockSpec((1, 128), lambda i: (0, 0)),
            ],
            out_specs=pl.BlockSpec((TB, 128), lambda i: (i, 0)),
            scratch_shapes=[
                pltpu.VMEM((24 * TB, 256), jnp.bfloat16),             # conv1+BN rows
                pltpu.VMEM((TB, 12 * 128), jnp.bfloat16),             # pool1+ReLU slab
                pltpu.VMEM((8 * TB, 640), jnp.bfloat16),              # conv2 band
                pltpu.VMEM((8 * TB, 256), jnp.bfloat16),              # conv2+BN rows
            ],
        ),
        compiler_params=pltpu.CompilerParams(
            dimension_semantics=("parallel",),
            vmem_limit_bytes=48 * 1024 * 1024,
        ),
    )(band, W1, B1, W2, B2, Wf1, Bf1, Wf2, Bf2)
    return out[:B, :10]


# ---------------------------------------------------------------------------
# Parameters (deterministic synthetic init, shapes from the module __init__)
# ---------------------------------------------------------------------------
def init_params(key):
    ks = jax.random.split(key, 12)

    def rnd(k, shape, fan_in):
        return jax.random.normal(k, shape, jnp.float32) / jnp.sqrt(float(fan_in))

    params = {
        "conv1_w": rnd(ks[0], (10, 1, 5, 5), 25),                    # Conv2d(1, 10, 5)
        "conv1_b": rnd(ks[1], (10,), 25),
        "bn1_g": 1.0 + 0.1 * jax.random.normal(ks[2], (10,), jnp.float32),
        "bn1_b": 0.1 * jax.random.normal(ks[3], (10,), jnp.float32),
        "bn1_m": 0.1 * jax.random.normal(ks[4], (10,), jnp.float32),
        "bn1_v": 1.0 + 0.1 * jnp.abs(jax.random.normal(ks[5], (10,), jnp.float32)),
        "conv2_w": rnd(ks[6], (20, 10, 5, 5), 250),                  # Conv2d(10, 20, 5)
        "conv2_b": rnd(ks[7], (20,), 250),
        "bn2_g": 1.0 + 0.1 * jax.random.normal(ks[8], (20,), jnp.float32),
        "bn2_b": 0.1 * jax.random.normal(ks[9], (20,), jnp.float32),
        "bn2_m": 0.1 * jax.random.normal(ks[10], (20,), jnp.float32),
        "bn2_v": 1.0 + 0.1 * jnp.abs(jax.random.normal(ks[11], (20,), jnp.float32)),
    }
    k2 = jax.random.split(jax.random.fold_in(key, 7), 4)
    params["fc1_w"] = rnd(k2[0], (50, 320), 320)                     # Linear(320, 50)
    params["fc1_b"] = rnd(k2[1], (50,), 320)
    params["fc2_w"] = rnd(k2[2], (10, 50), 50)                       # Linear(50, 10)
    params["fc2_b"] = rnd(k2[3], (10,), 50)
    return params


# ---------------------------------------------------------------------------
# Pure-JAX reference (eval mode) for a numerical self-check
# ---------------------------------------------------------------------------
def reference_forward(x, p):
    def conv(a, w, b):
        y = jax.lax.conv_general_dilated(a, w, (1, 1), "VALID",
                                         dimension_numbers=("NCHW", "OIHW", "NCHW"))
        return y + b[None, :, None, None]

    def bn(a, g, be, m, v):
        return (a - m[None, :, None, None]) / jnp.sqrt(v[None, :, None, None] + _EPS) \
            * g[None, :, None, None] + be[None, :, None, None]

    y = bn(conv(x, p["conv1_w"], p["conv1_b"]), p["bn1_g"], p["bn1_b"], p["bn1_m"], p["bn1_v"])
    y = jax.nn.relu(jnp.max(y.reshape(y.shape[0], 10, 12, 2, 12, 2), axis=(3, 5)))
    z = bn(conv(y, p["conv2_w"], p["conv2_b"]), p["bn2_g"], p["bn2_b"], p["bn2_m"], p["bn2_v"])
    z = jax.nn.relu(jnp.max(z.reshape(z.shape[0], 20, 4, 2, 4, 2), axis=(3, 5)))
    flat = z.reshape(z.shape[0], 320)
    h = jax.nn.relu(flat @ p["fc1_w"].T + p["fc1_b"])
    return h @ p["fc2_w"].T + p["fc2_b"]


if __name__ == "__main__":
    key = jax.random.PRNGKey(0)
    params = init_params(key)
    packed = pack_params(params)
    # Input shape implied by x.view(-1, 320): (B, 1, 28, 28); small batch for the demo.
    x = jax.random.normal(jax.random.fold_in(key, 123), (2, 1, 28, 28), jnp.float32)

    logits = forward(x, packed)
    jax.block_until_ready(logits)
    assert logits.shape == (2, 10)

    ref = reference_forward(x, params)
    max_err = float(jnp.max(jnp.abs(logits - ref)))
    # bf16 MXU operands + bf16 intermediates -> ~1e-2-level abs error vs f32 reference.
    assert max_err < 0.2, f"mismatch vs reference: max abs err {max_err}"
    print("KERNEL_OK")
</pallas_src>

<mosaic_0001>
module attributes {stable_mosaic.version = 11 : i64} {
  func.func @_lenet_kernel(%arg0: i32, %arg1: memref<384x140xbf16, #tpu.memory_space<vmem>>, %arg2: memref<140x256xbf16, #tpu.memory_space<vmem>>, %arg3: memref<1x256xf32, #tpu.memory_space<vmem>>, %arg4: memref<640x256xbf16, #tpu.memory_space<vmem>>, %arg5: memref<1x256xf32, #tpu.memory_space<vmem>>, %arg6: memref<512x128xbf16, #tpu.memory_space<vmem>>, %arg7: memref<1x128xf32, #tpu.memory_space<vmem>>, %arg8: memref<128x128xbf16, #tpu.memory_space<vmem>>, %arg9: memref<1x128xf32, #tpu.memory_space<vmem>>, %arg10: memref<16x128xf32, #tpu.memory_space<vmem>>, %arg11: memref<384x256xbf16, #tpu.memory_space<vmem>>, %arg12: memref<16x1536xbf16, #tpu.memory_space<vmem>>, %arg13: memref<128x640xbf16, #tpu.memory_space<vmem>>, %arg14: memref<128x256xbf16, #tpu.memory_space<vmem>>) attributes {dimension_semantics = [#tpu.dimension_semantics<parallel>], iteration_bounds = array<i64: 1>, scalar_prefetch = 0 : i64, scratch_operands = 4 : i64, tpu.core_type = #tpu.core_type<tc>, window_params = [{transform_indices = @transform_0, window_bounds = array<i64: 384, 140>}, {pipeline_mode = #tpu.pipeline_mode<synchronous>, transform_indices = @transform_1, window_bounds = array<i64: 140, 256>}, {pipeline_mode = #tpu.pipeline_mode<synchronous>, transform_indices = @transform_2, window_bounds = array<i64: 1, 256>}, {pipeline_mode = #tpu.pipeline_mode<synchronous>, transform_indices = @transform_3, window_bounds = array<i64: 640, 256>}, {pipeline_mode = #tpu.pipeline_mode<synchronous>, transform_indices = @transform_4, window_bounds = array<i64: 1, 256>}, {pipeline_mode = #tpu.pipeline_mode<synchronous>, transform_indices = @transform_5, window_bounds = array<i64: 512, 128>}, {pipeline_mode = #tpu.pipeline_mode<synchronous>, transform_indices = @transform_6, window_bounds = array<i64: 1, 128>}, {pipeline_mode = #tpu.pipeline_mode<synchronous>, transform_indices = @transform_7, window_bounds = array<i64: 128, 128>}, {pipeline_mode = #tpu.pipeline_mode<synchronous>, transform_indices = @transform_8, window_bounds = array<i64: 1, 128>}, {transform_indices = @transform_9, window_bounds = array<i64: 16, 128>}]} {
    %c0 = arith.constant 0 : index
    %c0_0 = arith.constant 0 : index
    %0 = vector.load %arg1[%c0, %c0_0] : memref<384x140xbf16, #tpu.memory_space<vmem>>, vector<384x140xbf16>
    %c0_1 = arith.constant 0 : index
    %c0_2 = arith.constant 0 : index
    %1 = vector.load %arg2[%c0_1, %c0_2] : memref<140x256xbf16, #tpu.memory_space<vmem>>, vector<140x256xbf16>
    %cst = arith.constant dense<0.000000e+00> : vector<384x256xf32>
    %2 = tpu.matmul %0, %1, %cst {dimension_numbers = #tpu.dot_dimension_numbers<[1], [0], [0], [1], [0, 0, 1, 1], [], []>} : vector<384x140xbf16>, vector<140x256xbf16>, vector<384x256xf32> -> vector<384x256xf32>
    %c0_3 = arith.constant 0 : index
    %c0_4 = arith.constant 0 : index
    %3 = vector.load %arg3[%c0_3, %c0_4] : memref<1x256xf32, #tpu.memory_space<vmem>>, vector<1x256xf32>
    %4 = vector.broadcast %3 : vector<1x256xf32> to vector<384x256xf32>
    %5 = arith.addf %2, %4 : vector<384x256xf32>
    %6 = arith.truncf %5 : vector<384x256xf32> to vector<384x256xbf16>
    %c0_5 = arith.constant 0 : index
    %c0_6 = arith.constant 0 : index
    %7 = vector.load %arg11[%c0_5, %c0_6] : memref<384x256xbf16, #tpu.memory_space<vmem>>, vector<384x256xbf16>
    tpu.vector_store %arg11[%c0_5, %c0_6], %6 {strides = array<i32>} : memref<384x256xbf16, #tpu.memory_space<vmem>>, vector<384x256xbf16>,
    %c0_7 = arith.constant 0 : index
    %c0_8 = arith.constant 0 : index
    %8 = vector.load %arg11[%c0_7, %c0_8] : memref<384x256xbf16, #tpu.memory_space<vmem>>, vector<16x256xbf16>
    %c16 = arith.constant 16 : index
    %c0_9 = arith.constant 0 : index
    %9 = vector.load %arg11[%c16, %c0_9] : memref<384x256xbf16, #tpu.memory_space<vmem>>, vector<16x256xbf16>
    %10 = arith.maximumf %8, %9 : vector<16x256xbf16>
    %11 = vector.extract_strided_slice %10 {offsets = [0, 0], sizes = [16, 128], strides = [1, 1]} : vector<16x256xbf16> to vector<16x128xbf16>
    %12 = vector.extract_strided_slice %10 {offsets = [0, 128], sizes = [16, 128], strides = [1, 1]} : vector<16x256xbf16> to vector<16x128xbf16>
    %13 = arith.maximumf %11, %12 : vector<16x128xbf16>
    %cst_10 = arith.constant 0.000000e+00 : bf16
    %14 = vector.broadcast %cst_10 : bf16 to vector<16x128xbf16>
    %15 = arith.maximumf %13, %14 : vector<16x128xbf16>
    %c0_11 = arith.constant 0 : index
    %c0_12 = arith.constant 0 : index
    %16 = vector.load %arg12[%c0_11, %c0_12] : memref<16x1536xbf16, #tpu.memory_space<vmem>>, vector<16x128xbf16>
    tpu.vector_store %arg12[%c0_11, %c0_12], %15 {strides = array<i32>} : memref<16x1536xbf16, #tpu.memory_space<vmem>>, vector<16x128xbf16>,
    %c32 = arith.constant 32 : index
    %c0_13 = arith.constant 0 : index
    %17 = vector.load %arg11[%c32, %c0_13] : memref<384x256xbf16, #tpu.memory_space<vmem>>, vector<16x256xbf16>
    %c48 = arith.constant 48 : index
    %c0_14 = arith.constant 0 : index
    %18 = vector.load %arg11[%c48, %c0_14] : memref<384x256xbf16, #tpu.memory_space<vmem>>, vector<16x256xbf16>
    %19 = arith.maximumf %17, %18 : vector<16x256xbf16>
    %20 = vector.extract_strided_slice %19 {offsets = [0, 0], sizes = [16, 128], strides = [1, 1]} : vector<16x256xbf16> to vector<16x128xbf16>
    %21 = vector.extract_strided_slice %19 {offsets = [0, 128], sizes = [16, 128], strides = [1, 1]} : vector<16x256xbf16> to vector<16x128xbf16>
    %22 = arith.maximumf %20, %21 : vector<16x128xbf16>
    %cst_15 = arith.constant 0.000000e+00 : bf16
    %23 = vector.broadcast %cst_15 : bf16 to vector<16x128xbf16>
    %24 = arith.maximumf %22, %23 : vector<16x128xbf16>
    %c0_16 = arith.constant 0 : index
    %c128 = arith.constant 128 : index
    %25 = vector.load %arg12[%c0_16, %c128] : memref<16x1536xbf16, #tpu.memory_space<vmem>>, vector<16x128xbf16>
    tpu.vector_store %arg12[%c0_16, %c128], %24 {strides = array<i32>} : memref<16x1536xbf16, #tpu.memory_space<vmem>>, vector<16x128xbf16>,
    %c64 = arith.constant 64 : index
    %c0_17 = arith.constant 0 : index
    %26 = vector.load %arg11[%c64, %c0_17] : memref<384x256xbf16, #tpu.memory_space<vmem>>, vector<16x256xbf16>
    %c80 = arith.constant 80 : index
    %c0_18 = arith.constant 0 : index
    %27 = vector.load %arg11[%c80, %c0_18] : memref<384x256xbf16, #tpu.memory_space<vmem>>, vector<16x256xbf16>
    %28 = arith.maximumf %26, %27 : vector<16x256xbf16>
    %29 = vector.extract_strided_slice %28 {offsets = [0, 0], sizes = [16, 128], strides = [1, 1]} : vector<16x256xbf16> to vector<16x128xbf16>
    %30 = vector.extract_strided_slice %28 {offsets = [0, 128], sizes = [16, 128], strides = [1, 1]} : vector<16x256xbf16> to vector<16x128xbf16>
    %31 = arith.maximumf %29, %30 : vector<16x128xbf16>
    %cst_19 = arith.constant 0.000000e+00 : bf16
    %32 = vector.broadcast %cst_19 : bf16 to vector<16x128xbf16>
    %33 = arith.maximumf %31, %32 : vector<16x128xbf16>
    %c0_20 = arith.constant 0 : index
    %c256 = arith.constant 256 : index
    %34 = vector.load %arg12[%c0_20, %c256] : memref<16x1536xbf16, #tpu.memory_space<vmem>>, vector<16x128xbf16>
    tpu.vector_store %arg12[%c0_20, %c256], %33 {strides = array<i32>} : memref<16x1536xbf16, #tpu.memory_space<vmem>>, vector<16x128xbf16>,
    %c96 = arith.constant 96 : index
    %c0_21 = arith.constant 0 : index
    %35 = vector.load %arg11[%c96, %c0_21] : memref<384x256xbf16, #tpu.memory_space<vmem>>, vector<16x256xbf16>
    %c112 = arith.constant 112 : index
    %c0_22 = arith.constant 0 : index
    %36 = vector.load %arg11[%c112, %c0_22] : memref<384x256xbf16, #tpu.memory_space<vmem>>, vector<16x256xbf16>
    %37 = arith.maximumf %35, %36 : vector<16x256xbf16>
    %38 = vector.extract_strided_slice %37 {offsets = [0, 0], sizes = [16, 128], strides = [1, 1]} : vector<16x256xbf16> to vector<16x128xbf16>
    %39 = vector.extract_strided_slice %37 {offsets = [0, 128], sizes = [16, 128], strides = [1, 1]} : vector<16x256xbf16> to vector<16x128xbf16>
    %40 = arith.maximumf %38, %39 : vector<16x128xbf16>
    %cst_23 = arith.constant 0.000000e+00 : bf16
    %41 = vector.broadcast %cst_23 : bf16 to vector<16x128xbf16>
    %42 = arith.maximumf %40, %41 : vector<16x128xbf16>
    %c0_24 = arith.constant 0 : index
    %c384 = arith.constant 384 : index
    %43 = vector.load %arg12[%c0_24, %c384] : memref<16x1536xbf16, #tpu.memory_space<vmem>>, vector<16x128xbf16>
    tpu.vector_store %arg12[%c0_24, %c384], %42 {strides = array<i32>} : memref<16x1536xbf16, #tpu.memory_space<vmem>>, vector<16x128xbf16>,
    %c128_25 = arith.constant 128 : index
    %c0_26 = arith.constant 0 : index
    %44 = vector.load %arg11[%c128_25, %c0_26] : memref<384x256xbf16, #tpu.memory_space<vmem>>, vector<16x256xbf16>
    %c144 = arith.constant 144 : index
    %c0_27 = arith.constant 0 : index
    %45 = vector.load %arg11[%c144, %c0_27] : memref<384x256xbf16, #tpu.memory_space<vmem>>, vector<16x256xbf16>
    %46 = arith.maximumf %44, %45 : vector<16x256xbf16>
    %47 = vector.extract_strided_slice %46 {offsets = [0, 0], sizes = [16, 128], strides = [1, 1]} : vector<16x256xbf16> to vector<16x128xbf16>
    %48 = vector.extract_strided_slice %46 {offsets = [0, 128], sizes = [16, 128], strides = [1, 1]} : vector<16x256xbf16> to vector<16x128xbf16>
    %49 = arith.maximumf %47, %48 : vector<16x128xbf16>
    %cst_28 = arith.constant 0.000000e+00 : bf16
    %50 = vector.broadcast %cst_28 : bf16 to vector<16x128xbf16>
    %51 = arith.maximumf %49, %50 : vector<16x128xbf16>
    %c0_29 = arith.constant 0 : index
    %c512 = arith.constant 512 : index
    %52 = vector.load %arg12[%c0_29, %c512] : memref<16x1536xbf16, #tpu.memory_space<vmem>>, vector<16x128xbf16>
    tpu.vector_store %arg12[%c0_29, %c512], %51 {strides = array<i32>} : memref<16x1536xbf16, #tpu.memory_space<vmem>>, vector<16x128xbf16>,
    %c160 = arith.constant 160 : index
    %c0_30 = arith.constant 0 : index
    %53 = vector.load %arg11[%c160, %c0_30] : memref<384x256xbf16, #tpu.memory_space<vmem>>, vector<16x256xbf16>
    %c176 = arith.constant 176 : index
    %c0_31 = arith.constant 0 : index
    %54 = vector.load %arg11[%c176, %c0_31] : memref<384x256xbf16, #tpu.memory_space<vmem>>, vector<16x256xbf16>
    %55 = arith.maximumf %53, %54 : vector<16x256xbf16>
    %56 = vector.extract_strided_slice %55 {offsets = [0, 0], sizes = [16, 128], strides = [1, 1]} : vector<16x256xbf16> to vector<16x128xbf16>
    %57 = vector.extract_strided_slice %55 {offsets = [0, 128], sizes = [16, 128], strides = [1, 1]} : vector<16x256xbf16> to vector<16x128xbf16>
    %58 = arith.maximumf %56, %57 : vector<16x128xbf16>
    %cst_32 = arith.constant 0.000000e+00 : bf16
    %59 = vector.broadcast %cst_32 : bf16 to vector<16x128xbf16>
    %60 = arith.maximumf %58, %59 : vector<16x128xbf16>
    %c0_33 = arith.constant 0 : index
    %c640 = arith.constant 640 : index
    %61 = vector.load %arg12[%c0_33, %c640] : memref<16x1536xbf16, #tpu.memory_space<vmem>>, vector<16x128xbf16>
    tpu.vector_store %arg12[%c0_33, %c640], %60 {strides = array<i32>} : memref<16x1536xbf16, #tpu.memory_space<vmem>>, vector<16x128xbf16>,
    %c192 = arith.constant 192 : index
    %c0_34 = arith.constant 0 : index
    %62 = vector.load %arg11[%c192, %c0_34] : memref<384x256xbf16, #tpu.memory_space<vmem>>, vector<16x256xbf16>
    %c208 = arith.constant 208 : index
    %c0_35 = arith.constant 0 : index
    %63 = vector.load %arg11[%c208, %c0_35] : memref<384x256xbf16, #tpu.memory_space<vmem>>, vector<16x256xbf16>
    %64 = arith.maximumf %62, %63 : vector<16x256xbf16>
    %65 = vector.extract_strided_slice %64 {offsets = [0, 0], sizes = [16, 128], strides = [1, 1]} : vector<16x256xbf16> to vector<16x128xbf16>
    %66 = vector.extract_strided_slice %64 {offsets = [0, 128], sizes = [16, 128], strides = [1, 1]} : vector<16x256xbf16> to vector<16x128xbf16>
    %67 = arith.maximumf %65, %66 : vector<16x128xbf16>
    %cst_36 = arith.constant 0.000000e+00 : bf16
    %68 = vector.broadcast %cst_36 : bf16 to vector<16x128xbf16>
    %69 = arith.maximumf %67, %68 : vector<16x128xbf16>
    %c0_37 = arith.constant 0 : index
    %c768 = arith.constant 768 : index
    %70 = vector.load %arg12[%c0_37, %c768] : memref<16x1536xbf16, #tpu.memory_space<vmem>>, vector<16x128xbf16>
    tpu.vector_store %arg12[%c0_37, %c768], %69 {strides = array<i32>} : memref<16x1536xbf16, #tpu.memory_space<vmem>>, vector<16x128xbf16>,
    %c224 = arith.constant 224 : index
    %c0_38 = arith.constant 0 : index
    %71 = vector.load %arg11[%c224, %c0_38] : memref<384x256xbf16, #tpu.memory_space<vmem>>, vector<16x256xbf16>
    %c240 = arith.constant 240 : index
    %c0_39 = arith.constant 0 : index
    %72 = vector.load %arg11[%c240, %c0_39] : memref<384x256xbf16, #tpu.memory_space<vmem>>, vector<16x256xbf16>
    %73 = arith.maximumf %71, %72 : vector<16x256xbf16>
    %74 = vector.extract_strided_slice %73 {offsets = [0, 0], sizes = [16, 128], strides = [1, 1]} : vector<16x256xbf16> to vector<16x128xbf16>
    %75 = vector.extract_strided_slice %73 {offsets = [0, 128], sizes = [16, 128], strides = [1, 1]} : vector<16x256xbf16> to vector<16x128xbf16>
    %76 = arith.maximumf %74, %75 : vector<16x128xbf16>
    %cst_40 = arith.constant 0.000000e+00 : bf16
    %77 = vector.broadcast %cst_40 : bf16 to vector<16x128xbf16>
    %78 = arith.maximumf %76, %77 : vector<16x128xbf16>
    %c0_41 = arith.constant 0 : index
    %c896 = arith.constant 896 : index
    %79 = vector.load %arg12[%c0_41, %c896] : memref<16x1536xbf16, #tpu.memory_space<vmem>>, vector<16x128xbf16>
    tpu.vector_store %arg12[%c0_41, %c896], %78 {strides = array<i32>} : memref<16x1536xbf16, #tpu.memory_space<vmem>>, vector<16x128xbf16>,
    %c256_42 = arith.constant 256 : index
    %c0_43 = arith.constant 0 : index
    %80 = vector.load %arg11[%c256_42, %c0_43] : memref<384x256xbf16, #tpu.memory_space<vmem>>, vector<16x256xbf16>
    %c272 = arith.constant 272 : index
    %c0_44 = arith.constant 0 : index
    %81 = vector.load %arg11[%c272, %c0_44] : memref<384x256xbf16, #tpu.memory_space<vmem>>, vector<16x256xbf16>
    %82 = arith.maximumf %80, %81 : vector<16x256xbf16>
    %83 = vector.extract_strided_slice %82 {offsets = [0, 0], sizes = [16, 128], strides = [1, 1]} : vector<16x256xbf16> to vector<16x128xbf16>
    %84 = vector.extract_strided_slice %82 {offsets = [0, 128], sizes = [16, 128], strides = [1, 1]} : vector<16x256xbf16> to vector<16x128xbf16>
    %85 = arith.maximumf %83, %84 : vector<16x128xbf16>
    %cst_45 = arith.constant 0.000000e+00 : bf16
    %86 = vector.broadcast %cst_45 : bf16 to vector<16x128xbf16>
    %87 = arith.maximumf %85, %86 : vector<16x128xbf16>
    %c0_46 = arith.constant 0 : index
    %c1024 = arith.constant 1024 : index
    %88 = vector.load %arg12[%c0_46, %c1024] : memref<16x1536xbf16, #tpu.memory_space<vmem>>, vector<16x128xbf16>
    tpu.vector_store %arg12[%c0_46, %c1024], %87 {strides = array<i32>} : memref<16x1536xbf16, #tpu.memory_space<vmem>>, vector<16x128xbf16>,
    %c288 = arith.constant 288 : index
    %c0_47 = arith.constant 0 : index
    %89 = vector.load %arg11[%c288, %c0_47] : memref<384x256xbf16, #tpu.memory_space<vmem>>, vector<16x256xbf16>
    %c304 = arith.constant 304 : index
    %c0_48 = arith.constant 0 : index
    %90 = vector.load %arg11[%c304, %c0_48] : memref<384x256xbf16, #tpu.memory_space<vmem>>, vector<16x256xbf16>
    %91 = arith.maximumf %89, %90 : vector<16x256xbf16>
    %92 = vector.extract_strided_slice %91 {offsets = [0, 0], sizes = [16, 128], strides = [1, 1]} : vector<16x256xbf16> to vector<16x128xbf16>
    %93 = vector.extract_strided_slice %91 {offsets = [0, 128], sizes = [16, 128], strides = [1, 1]} : vector<16x256xbf16> to vector<16x128xbf16>
    %94 = arith.maximumf %92, %93 : vector<16x128xbf16>
    %cst_49 = arith.constant 0.000000e+00 : bf16
    %95 = vector.broadcast %cst_49 : bf16 to vector<16x128xbf16>
    %96 = arith.maximumf %94, %95 : vector<16x128xbf16>
    %c0_50 = arith.constant 0 : index
    %c1152 = arith.constant 1152 : index
    %97 = vector.load %arg12[%c0_50, %c1152] : memref<16x1536xbf16, #tpu.memory_space<vmem>>, vector<16x128xbf16>
    tpu.vector_store %arg12[%c0_50, %c1152], %96 {strides = array<i32>} : memref<16x1536xbf16, #tpu.memory_space<vmem>>, vector<16x128xbf16>,
    %c320 = arith.constant 320 : index
    %c0_51 = arith.constant 0 : index
    %98 = vector.load %arg11[%c320, %c0_51] : memref<384x256xbf16, #tpu.memory_space<vmem>>, vector<16x256xbf16>
    %c336 = arith.constant 336 : index
    %c0_52 = arith.constant 0 : index
    %99 = vector.load %arg11[%c336, %c0_52] : memref<384x256xbf16, #tpu.memory_space<vmem>>, vector<16x256xbf16>
    %100 = arith.maximumf %98, %99 : vector<16x256xbf16>
    %101 = vector.extract_strided_slice %100 {offsets = [0, 0], sizes = [16, 128], strides = [1, 1]} : vector<16x256xbf16> to vector<16x128xbf16>
    %102 = vector.extract_strided_slice %100 {offsets = [0, 128], sizes = [16, 128], strides = [1, 1]} : vector<16x256xbf16> to vector<16x128xbf16>
    %103 = arith.maximumf %101, %102 : vector<16x128xbf16>
    %cst_53 = arith.constant 0.000000e+00 : bf16
    %104 = vector.broadcast %cst_53 : bf16 to vector<16x128xbf16>
    %105 = arith.maximumf %103, %104 : vector<16x128xbf16>
    %c0_54 = arith.constant 0 : index
    %c1280 = arith.constant 1280 : index
    %106 = vector.load %arg12[%c0_54, %c1280] : memref<16x1536xbf16, #tpu.memory_space<vmem>>, vector<16x128xbf16>
    tpu.vector_store %arg12[%c0_54, %c1280], %105 {strides = array<i32>} : memref<16x1536xbf16, #tpu.memory_space<vmem>>, vector<16x128xbf16>,
    %c352 = arith.constant 352 : index
    %c0_55 = arith.constant 0 : index
    %107 = vector.load %arg11[%c352, %c0_55] : memref<384x256xbf16, #tpu.memory_space<vmem>>, vector<16x256xbf16>
    %c368 = arith.constant 368 : index
    %c0_56 = arith.constant 0 : index
    %108 = vector.load %arg11[%c368, %c0_56] : memref<384x256xbf16, #tpu.memory_space<vmem>>, vector<16x256xbf16>
    %109 = arith.maximumf %107, %108 : vector<16x256xbf16>
    %110 = vector.extract_strided_slice %109 {offsets = [0, 0], sizes = [16, 128], strides = [1, 1]} : vector<16x256xbf16> to vector<16x128xbf16>
    %111 = vector.extract_strided_slice %109 {offsets = [0, 128], sizes = [16, 128], strides = [1, 1]} : vector<16x256xbf16> to vector<16x128xbf16>
    %112 = arith.maximumf %110, %111 : vector<16x128xbf16>
    %cst_57 = arith.constant 0.000000e+00 : bf16
    %113 = vector.broadcast %cst_57 : bf16 to vector<16x128xbf16>
    %114 = arith.maximumf %112, %113 : vector<16x128xbf16>
    %c0_58 = arith.constant 0 : index
    %c1408 = arith.constant 1408 : index
    %115 = vector.load %arg12[%c0_58, %c1408] : memref<16x1536xbf16, #tpu.memory_space<vmem>>, vector<16x128xbf16>
    tpu.vector_store %arg12[%c0_58, %c1408], %114 {strides = array<i32>} : memref<16x1536xbf16, #tpu.memory_space<vmem>>, vector<16x128xbf16>,
    %c0_59 = arith.constant 0 : index
    %c0_60 = arith.constant 0 : index
    %116 = vector.load %arg12[%c0_59, %c0_60] : memref<16x1536xbf16, #tpu.memory_space<vmem>>, vector<16x640xbf16>
    %c0_61 = arith.constant 0 : index
    %c0_62 = arith.constant 0 : index
    %117 = vector.load %arg13[%c0_61, %c0_62] : memref<128x640xbf16, #tpu.memory_space<vmem>>, vector<16x640xbf16>
    tpu.vector_store %arg13[%c0_61, %c0_62], %116 {strides = array<i32>} : memref<128x640xbf16, #tpu.memory_space<vmem>>, vector<16x640xbf16>,
    %c0_63 = arith.constant 0 : index
    %c128_64 = arith.constant 128 : index
    %118 = vector.load %arg12[%c0_63, %c128_64] : memref<16x1536xbf16, #tpu.memory_space<vmem>>, vector<16x640xbf16>
    %c16_65 = arith.constant 16 : index
    %c0_66 = arith.constant 0 : index
    %119 = vector.load %arg13[%c16_65, %c0_66] : memref<128x640xbf16, #tpu.memory_space<vmem>>, vector<16x640xbf16>
    tpu.vector_store %arg13[%c16_65, %c0_66], %118 {strides = array<i32>} : memref<128x640xbf16, #tpu.memory_space<vmem>>, vector<16x640xbf16>,
    %c0_67 = arith.constant 0 : index
    %c256_68 = arith.constant 256 : index
    %120 = vector.load %arg12[%c0_67, %c256_68] : memref<16x1536xbf16, #tpu.memory_space<vmem>>, vector<16x640xbf16>
    %c32_69 = arith.constant 32 : index
    %c0_70 = arith.constant 0 : index
    %121 = vector.load %arg13[%c32_69, %c0_70] : memref<128x640xbf16, #tpu.memory_space<vmem>>, vector<16x640xbf16>
    tpu.vector_store %arg13[%c32_69, %c0_70], %120 {strides = array<i32>} : memref<128x640xbf16, #tpu.memory_space<vmem>>, vector<16x640xbf16>,
    %c0_71 = arith.constant 0 : index
    %c384_72 = arith.constant 384 : index
    %122 = vector.load %arg12[%c0_71, %c384_72] : memref<16x1536xbf16, #tpu.memory_space<vmem>>, vector<16x640xbf16>
    %c48_73 = arith.constant 48 : index
    %c0_74 = arith.constant 0 : index
    %123 = vector.load %arg13[%c48_73, %c0_74] : memref<128x640xbf16, #tpu.memory_space<vmem>>, vector<16x640xbf16>
    tpu.vector_store %arg13[%c48_73, %c0_74], %122 {strides = array<i32>} : memref<128x640xbf16, #tpu.memory_space<vmem>>, vector<16x640xbf16>,
    %c0_75 = arith.constant 0 : index
    %c512_76 = arith.constant 512 : index
    %124 = vector.load %arg12[%c0_75, %c512_76] : memref<16x1536xbf16, #tpu.memory_space<vmem>>, vector<16x640xbf16>
    %c64_77 = arith.constant 64 : index
    %c0_78 = arith.constant 0 : index
    %125 = vector.load %arg13[%c64_77, %c0_78] : memref<128x640xbf16, #tpu.memory_space<vmem>>, vector<16x640xbf16>
    tpu.vector_store %arg13[%c64_77, %c0_78], %124 {strides = array<i32>} : memref<128x640xbf16, #tpu.memory_space<vmem>>, vector<16x640xbf16>,
    %c0_79 = arith.constant 0 : index
    %c640_80 = arith.constant 640 : index
    %126 = vector.load %arg12[%c0_79, %c640_80] : memref<16x1536xbf16, #tpu.memory_space<vmem>>, vector<16x640xbf16>
    %c80_81 = arith.constant 80 : index
    %c0_82 = arith.constant 0 : index
    %127 = vector.load %arg13[%c80_81, %c0_82] : memref<128x640xbf16, #tpu.memory_space<vmem>>, vector<16x640xbf16>
    tpu.vector_store %arg13[%c80_81, %c0_82], %126 {strides = array<i32>} : memref<128x640xbf16, #tpu.memory_space<vmem>>, vector<16x640xbf16>,
    %c0_83 = arith.constant 0 : index
    %c768_84 = arith.constant 768 : index
    %128 = vector.load %arg12[%c0_83, %c768_84] : memref<16x1536xbf16, #tpu.memory_space<vmem>>, vector<16x640xbf16>
    %c96_85 = arith.constant 96 : index
    %c0_86 = arith.constant 0 : index
    %129 = vector.load %arg13[%c96_85, %c0_86] : memref<128x640xbf16, #tpu.memory_space<vmem>>, vector<16x640xbf16>
    tpu.vector_store %arg13[%c96_85, %c0_86], %128 {strides = array<i32>} : memref<128x640xbf16, #tpu.memory_space<vmem>>, vector<16x640xbf16>,
    %c0_87 = arith.constant 0 : index
    %c896_88 = arith.constant 896 : index
    %130 = vector.load %arg12[%c0_87, %c896_88] : memref<16x1536xbf16, #tpu.memory_space<vmem>>, vector<16x640xbf16>
    %c112_89 = arith.constant 112 : index
    %c0_90 = arith.constant 0 : index
    %131 = vector.load %arg13[%c112_89, %c0_90] : memref<128x640xbf16, #tpu.memory_space<vmem>>, vector<16x640xbf16>
    tpu.vector_store %arg13[%c112_89, %c0_90], %130 {strides = array<i32>} : memref<128x640xbf16, #tpu.memory_space<vmem>>, vector<16x640xbf16>,
    %c0_91 = arith.constant 0 : index
    %c0_92 = arith.constant 0 : index
    %132 = vector.load %arg13[%c0_91, %c0_92] : memref<128x640xbf16, #tpu.memory_space<vmem>>, vector<128x640xbf16>
    %c0_93 = arith.constant 0 : index
    %c0_94 = arith.constant 0 : index
    %133 = vector.load %arg4[%c0_93, %c0_94] : memref<640x256xbf16, #tpu.memory_space<vmem>>, vector<640x256xbf16>
    %cst_95 = arith.constant dense<0.000000e+00> : vector<128x256xf32>
    %134 = tpu.matmul %132, %133, %cst_95 {dimension_numbers = #tpu.dot_dimension_numbers<[1], [0], [0], [1], [0, 0, 1, 1], [], []>} : vector<128x640xbf16>, vector<640x256xbf16>, vector<128x256xf32> -> vector<128x256xf32>
    %c0_96 = arith.constant 0 : index
    %c0_97 = arith.constant 0 : index
    %135 = vector.load %arg5[%c0_96, %c0_97] : memref<1x256xf32, #tpu.memory_space<vmem>>, vector<1x256xf32>
    %136 = vector.broadcast %135 : vector<1x256xf32> to vector<128x256xf32>
    %137 = arith.addf %134, %136 : vector<128x256xf32>
    %138 = arith.truncf %137 : vector<128x256xf32> to vector<128x256xbf16>
    %c0_98 = arith.constant 0 : index
    %c0_99 = arith.constant 0 : index
    %139 = vector.load %arg14[%c0_98, %c0_99] : memref<128x256xbf16, #tpu.memory_space<vmem>>, vector<128x256xbf16>
    tpu.vector_store %arg14[%c0_98, %c0_99], %138 {strides = array<i32>} : memref<128x256xbf16, #tpu.memory_space<vmem>>, vector<128x256xbf16>,
    %c0_100 = arith.constant 0 : index
    %c0_101 = arith.constant 0 : index
    %140 = vector.load %arg14[%c0_100, %c0_101] : memref<128x256xbf16, #tpu.memory_space<vmem>>, vector<16x256xbf16>
    %c16_102 = arith.constant 16 : index
    %c0_103 = arith.constant 0 : index
    %141 = vector.load %arg14[%c16_102, %c0_103] : memref<128x256xbf16, #tpu.memory_space<vmem>>, vector<16x256xbf16>
    %142 = arith.maximumf %140, %141 : vector<16x256xbf16>
    %143 = vector.extract_strided_slice %142 {offsets = [0, 0], sizes = [16, 128], strides = [1, 1]} : vector<16x256xbf16> to vector<16x128xbf16>
    %144 = vector.extract_strided_slice %142 {offsets = [0, 128], sizes = [16, 128], strides = [1, 1]} : vector<16x256xbf16> to vector<16x128xbf16>
    %145 = arith.maximumf %143, %144 : vector<16x128xbf16>
    %cst_104 = arith.constant 0.000000e+00 : bf16
    %146 = vector.broadcast %cst_104 : bf16 to vector<16x128xbf16>
    %147 = arith.maximumf %145, %146 : vector<16x128xbf16>
    %c32_105 = arith.constant 32 : index
    %c0_106 = arith.constant 0 : index
    %148 = vector.load %arg14[%c32_105, %c0_106] : memref<128x256xbf16, #tpu.memory_space<vmem>>, vector<16x256xbf16>
    %c48_107 = arith.constant 48 : index
    %c0_108 = arith.constant 0 : index
    %149 = vector.load %arg14[%c48_107, %c0_108] : memref<128x256xbf16, #tpu.memory_space<vmem>>, vector<16x256xbf16>
    %150 = arith.maximumf %148, %149 : vector<16x256xbf16>
    %151 = vector.extract_strided_slice %150 {offsets = [0, 0], sizes = [16, 128], strides = [1, 1]} : vector<16x256xbf16> to vector<16x128xbf16>
    %152 = vector.extract_strided_slice %150 {offsets = [0, 128], sizes = [16, 128], strides = [1, 1]} : vector<16x256xbf16> to vector<16x128xbf16>
    %153 = arith.maximumf %151, %152 : vector<16x128xbf16>
    %cst_109 = arith.constant 0.000000e+00 : bf16
    %154 = vector.broadcast %cst_109 : bf16 to vector<16x128xbf16>
    %155 = arith.maximumf %153, %154 : vector<16x128xbf16>
    %c64_110 = arith.constant 64 : index
    %c0_111 = arith.constant 0 : index
    %156 = vector.load %arg14[%c64_110, %c0_111] : memref<128x256xbf16, #tpu.memory_space<vmem>>, vector<16x256xbf16>
    %c80_112 = arith.constant 80 : index
    %c0_113 = arith.constant 0 : index
    %157 = vector.load %arg14[%c80_112, %c0_113] : memref<128x256xbf16, #tpu.memory_space<vmem>>, vector<16x256xbf16>
    %158 = arith.maximumf %156, %157 : vector<16x256xbf16>
    %159 = vector.extract_strided_slice %158 {offsets = [0, 0], sizes = [16, 128], strides = [1, 1]} : vector<16x256xbf16> to vector<16x128xbf16>
    %160 = vector.extract_strided_slice %158 {offsets = [0, 128], sizes = [16, 128], strides = [1, 1]} : vector<16x256xbf16> to vector<16x128xbf16>
    %161 = arith.maximumf %159, %160 : vector<16x128xbf16>
    %cst_114 = arith.constant 0.000000e+00 : bf16
    %162 = vector.broadcast %cst_114 : bf16 to vector<16x128xbf16>
    %163 = arith.maximumf %161, %162 : vector<16x128xbf16>
    %c96_115 = arith.constant 96 : index
    %c0_116 = arith.constant 0 : index
    %164 = vector.load %arg14[%c96_115, %c0_116] : memref<128x256xbf16, #tpu.memory_space<vmem>>, vector<16x256xbf16>
    %c112_117 = arith.constant 112 : index
    %c0_118 = arith.constant 0 : index
    %165 = vector.load %arg14[%c112_117, %c0_118] : memref<128x256xbf16, #tpu.memory_space<vmem>>, vector<16x256xbf16>
    %166 = arith.maximumf %164, %165 : vector<16x256xbf16>
    %167 = vector.extract_strided_slice %166 {offsets = [0, 0], sizes = [16, 128], strides = [1, 1]} : vector<16x256xbf16> to vector<16x128xbf16>
    %168 = vector.extract_strided_slice %166 {offsets = [0, 128], sizes = [16, 128], strides = [1, 1]} : vector<16x256xbf16> to vector<16x128xbf16>
    %169 = arith.maximumf %167, %168 : vector<16x128xbf16>
    %cst_119 = arith.constant 0.000000e+00 : bf16
    %170 = vector.broadcast %cst_119 : bf16 to vector<16x128xbf16>
    %171 = arith.maximumf %169, %170 : vector<16x128xbf16>
    %172 = tpu.concatenate %147, %155, %163, %171 in 1 : vector<16x128xbf16>, vector<16x128xbf16>, vector<16x128xbf16>, vector<16x128xbf16> -> vector<16x512xbf16>
    %c0_120 = arith.constant 0 : index
    %c0_121 = arith.constant 0 : index
    %173 = vector.load %arg6[%c0_120, %c0_121] : memref<512x128xbf16, #tpu.memory_space<vmem>>, vector<512x128xbf16>
    %cst_122 = arith.constant dense<0.000000e+00> : vector<16x128xf32>
    %174 = tpu.matmul %172, %173, %cst_122 {dimension_numbers = #tpu.dot_dimension_numbers<[1], [0], [0], [1], [0, 0, 1, 1], [], []>} : vector<16x512xbf16>, vector<512x128xbf16>, vector<16x128xf32> -> vector<16x128xf32>
    %c0_123 = arith.constant 0 : index
    %c0_124 = arith.constant 0 : index
    %175 = vector.load %arg7[%c0_123, %c0_124] : memref<1x128xf32, #tpu.memory_space<vmem>>, vector<1x128xf32>
    %176 = vector.broadcast %175 : vector<1x128xf32> to vector<16x128xf32>
    %177 = arith.addf %174, %176 : vector<16x128xf32>
    %cst_125 = arith.constant 0.000000e+00 : f32
    %178 = vector.broadcast %cst_125 : f32 to vector<16x128xf32>
    %179 = arith.maximumf %177, %178 : vector<16x128xf32>
    %180 = arith.truncf %179 : vector<16x128xf32> to vector<16x128xbf16>
    %c0_126 = arith.constant 0 : index
    %c0_127 = arith.constant 0 : index
    %181 = vector.load %arg8[%c0_126, %c0_127] : memref<128x128xbf16, #tpu.memory_space<vmem>>, vector<128x128xbf16>
    %cst_128 = arith.constant dense<0.000000e+00> : vector<16x128xf32>
    %182 = tpu.matmul %180, %181, %cst_128 {dimension_numbers = #tpu.dot_dimension_numbers<[1], [0], [0], [1], [0, 0, 1, 1], [], []>} : vector<16x128xbf16>, vector<128x128xbf16>, vector<16x128xf32> -> vector<16x128xf32>
    %c0_129 = arith.constant 0 : index
    %c0_130 = arith.constant 0 : index
    %183 = vector.load %arg9[%c0_129, %c0_130] : memref<1x128xf32, #tpu.memory_space<vmem>>, vector<1x128xf32>
    %184 = vector.broadcast %183 : vector<1x128xf32> to vector<16x128xf32>
    %185 = arith.addf %182, %184 : vector<16x128xf32>
    %c0_131 = arith.constant 0 : index
    %c0_132 = arith.constant 0 : index
    %186 = vector.load %arg10[%c0_131, %c0_132] : memref<16x128xf32, #tpu.memory_space<vmem>>, vector<16x128xf32>
    tpu.vector_store %arg10[%c0_131, %c0_132], %185 {strides = array<i32>} : memref<16x128xf32, #tpu.memory_space<vmem>>, vector<16x128xf32>,
    return
  }
  func.func @transform_0(%arg0: i32) -> (i32, i32) {
    %c0_i32 = arith.constant 0 : i32
    %c0_i32_0 = arith.constant 0 : i32
    return %arg0, %c0_i32 : i32, i32
  }
  func.func @transform_1(%arg0: i32) -> (i32, i32) {
    %c0_i32 = arith.constant 0 : i32
    %c0_i32_0 = arith.constant 0 : i32
    %c0_i32_1 = arith.constant 0 : i32
    return %c0_i32, %c0_i32_0 : i32, i32
  }
  func.func @transform_2(%arg0: i32) -> (i32, i32) {
    %c0_i32 = arith.constant 0 : i32
    %c0_i32_0 = arith.constant 0 : i32
    %c0_i32_1 = arith.constant 0 : i32
    return %c0_i32, %c0_i32_0 : i32, i32
  }
  func.func @transform_3(%arg0: i32) -> (i32, i32) {
    %c0_i32 = arith.constant 0 : i32
    %c0_i32_0 = arith.constant 0 : i32
    %c0_i32_1 = arith.constant 0 : i32
    return %c0_i32, %c0_i32_0 : i32, i32
  }
  func.func @transform_4(%arg0: i32) -> (i32, i32) {
    %c0_i32 = arith.constant 0 : i32
    %c0_i32_0 = arith.constant 0 : i32
    %c0_i32_1 = arith.constant 0 : i32
    return %c0_i32, %c0_i32_0 : i32, i32
  }
  func.func @transform_5(%arg0: i32) -> (i32, i32) {
    %c0_i32 = arith.constant 0 : i32
    %c0_i32_0 = arith.constant 0 : i32
    %c0_i32_1 = arith.constant 0 : i32
    return %c0_i32, %c0_i32_0 : i32, i32
  }
  func.func @transform_6(%arg0: i32) -> (i32, i32) {
    %c0_i32 = arith.constant 0 : i32
    %c0_i32_0 = arith.constant 0 : i32
    %c0_i32_1 = arith.constant 0 : i32
    return %c0_i32, %c0_i32_0 : i32, i32
  }
  func.func @transform_7(%arg0: i32) -> (i32, i32) {
    %c0_i32 = arith.constant 0 : i32
    %c0_i32_0 = arith.constant 0 : i32
    %c0_i32_1 = arith.constant 0 : i32
    return %c0_i32, %c0_i32_0 : i32, i32
  }
  func.func @transform_8(%arg0: i32) -> (i32, i32) {
    %c0_i32 = arith.constant 0 : i32
    %c0_i32_0 = arith.constant 0 : i32
    %c0_i32_1 = arith.constant 0 : i32
    return %c0_i32, %c0_i32_0 : i32, i32
  }
  func.func @transform_9(%arg0: i32) -> (i32, i32) {
    %c0_i32 = arith.constant 0 : i32
    %c0_i32_0 = arith.constant 0 : i32
    return %arg0, %c0_i32 : i32, i32
  }
}

</mosaic_0001>

<llo_original>
// kernel: forward.1
$region0: #{forward.1}
  #allocation0 [shape = 'u32[]', space=smem, size = 0x4, offset = 0x4, fixed_abs, tag = 'smem constant byte address 0x4 - core index']
  #allocation1 [shape = 'u32[144,128]{1,0:T(1,128)}', space=vmem, size = 0x12000, scoped, tag = 'internal scratch']
  #allocation2 [shape = 'bf16[384,256]{1,0:T(16,128)(2,1)}', space=vmem, size = 0x30000, scoped, tag = 'scratch operand']
  #allocation3 [shape = 'bf16[16,1536]{1,0:T(16,128)(2,1)}', space=vmem, size = 0xc000, scoped, tag = 'scratch operand']
  #allocation4 [shape = 'bf16[128,640]{1,0:T(16,128)(2,1)}', space=vmem, size = 0x28000, scoped, tag = 'scratch operand']
  #allocation5 [shape = 'bf16[128,256]{1,0:T(16,128)(2,1)}', space=vmem, size = 0x10000, scoped, tag = 'scratch operand']
  %s0 = inlined_call_operand.vmem [shape: bf16[384,140], index: 0, kind: input, shape index: {}]
  %s1 = inlined_call_operand.vmem [shape: bf16[140,256], index: 1, kind: input, shape index: {}]
  %s2 = inlined_call_operand.vmem [shape: f32[1,256], index: 2, kind: input, shape index: {}]
  %s3 = inlined_call_operand.vmem [shape: bf16[640,256], index: 3, kind: input, shape index: {}]
  %s4 = inlined_call_operand.vmem [shape: f32[1,256], index: 4, kind: input, shape index: {}]
  %s5 = inlined_call_operand.vmem [shape: bf16[512,128], index: 5, kind: input, shape index: {}]
  %s6 = inlined_call_operand.vmem [shape: f32[1,128], index: 6, kind: input, shape index: {}]
  %s7 = inlined_call_operand.vmem [shape: bf16[128,128], index: 7, kind: input, shape index: {}]
  %s8 = inlined_call_operand.vmem [shape: f32[1,128], index: 8, kind: input, shape index: {}]
  %s9 = inlined_call_operand.vmem [shape: f32[16,128], index: 9, kind: output, shape index: {}]
  %s10 = sld [smem:[#allocation0]]
  $region46: #{forward.1} parent=0
    _
  %s12 = ssub.s32 1, %s10
  %s13 = scalar_select 0, %s12, %s10
  // Predicated region
  $region2: #{forward.1} parent=0 // pred_check
    _
  $region3: #{forward.1} parent=0 // pred_check_branch
    %15 = sbr.rel (0) target = $region5
  $region4: #{forward.1} parent=0 // pred_region
    _
  $region5: #{forward.1} parent=0 // pred_fallthru
    _
  // Predicated region
  $region6: #{forward.1} parent=0 // pred_check
    _
  $region7: #{forward.1} parent=0 // pred_check_branch
    %17 = sbr.rel (0) target = $region9
  $region8: #{forward.1} parent=0 // pred_region
    _
  $region9: #{forward.1} parent=0 // pred_fallthru
    _
  // Predicated region
  $region10: #{forward.1} parent=0 // pred_check
    _
  $region11: #{forward.1} parent=0 // pred_check_branch
    %19 = sbr.rel (0) target = $region13
  $region12: #{forward.1} parent=0 // pred_region
    _
  $region13: #{forward.1} parent=0 // pred_fallthru
    _
  // Predicated region
  $region14: #{forward.1} parent=0 // pred_check
    _
  $region15: #{forward.1} parent=0 // pred_check_branch
    %21 = sbr.rel (0) target = $region17
  $region16: #{forward.1} parent=0 // pred_region
    _
  $region17: #{forward.1} parent=0 // pred_fallthru
    _
  // Predicated region
  $region18: #{forward.1} parent=0 // pred_check
    _
  $region19: #{forward.1} parent=0 // pred_check_branch
    %23 = sbr.rel (0) target = $region21
  $region20: #{forward.1} parent=0 // pred_region
    _
  $region21: #{forward.1} parent=0 // pred_fallthru
    _
  // Predicated region
  $region22: #{forward.1} parent=0 // pred_check
    _
  $region23: #{forward.1} parent=0 // pred_check_branch
    %25 = sbr.rel (0) target = $region25
  $region24: #{forward.1} parent=0 // pred_region
    _
  $region25: #{forward.1} parent=0 // pred_fallthru
    _
  // Predicated region
  $region26: #{forward.1} parent=0 // pred_check
    _
  $region27: #{forward.1} parent=0 // pred_check_branch
    %27 = sbr.rel (0) target = $region29
  $region28: #{forward.1} parent=0 // pred_region
    _
  $region29: #{forward.1} parent=0 // pred_fallthru
    _
  // Predicated region
  $region30: #{forward.1} parent=0 // pred_check
    _
  $region31: #{forward.1} parent=0 // pred_check_branch
    %29 = sbr.rel (0) target = $region33
  $region32: #{forward.1} parent=0 // pred_region
    _
  $region33: #{forward.1} parent=0 // pred_fallthru
    _
  // Predicated region
  $region34: #{forward.1} parent=0 // pred_check
    _
  $region35: #{forward.1} parent=0 // pred_check_branch
    %31 = sbr.rel (0) target = $region37
  $region36: #{forward.1} parent=0 // pred_region
    _
  $region37: #{forward.1} parent=0 // pred_fallthru
    _
  %v33 = vld [vmem:[%s0] sm:$0xff]
  %v34 = vld [vmem:[%s0 + $0x8] sm:$0xff]
  %v35 = vld [vmem:[%s0 + $0x10] sm:$0xff]
  %v36 = vld [vmem:[%s0 + $0x18] sm:$0xff]
  %v37 = vld [vmem:[%s0 + $0x20] sm:$0xff]
  %v38 = vld [vmem:[%s0 + $0x28] sm:$0xff]
  %v39 = vld [vmem:[%s0 + $0x30] sm:$0xff]
  %v40 = vld [vmem:[%s0 + $0x38] sm:$0xff]
  %v41 = vld [vmem:[%s0 + $0x40] sm:$0xff]
  %v42 = vld [vmem:[%s0 + $0x48] sm:$0xff]
  %v43 = vld [vmem:[%s0 + $0x50] sm:$0xff]
  %v44 = vld [vmem:[%s0 + $0x58] sm:$0xff]
  %v45 = vld [vmem:[%s0 + $0x60] sm:$0xff]
  %v46 = vld [vmem:[%s0 + $0x68] sm:$0xff]
  %v47 = vld [vmem:[%s0 + $0x70] sm:$0xff]
  %v48 = vld [vmem:[%s0 + $0x78] sm:$0xff]
  %v49 = vld [vmem:[%s0 + $0x80] sm:$0xff]
  %v50 = vld [vmem:[%s0 + $0x88] sm:$0xff]
  %v51 = vld [vmem:[%s0 + $0x90] sm:$0xff]
  %v52 = vld [vmem:[%s0 + $0x98] sm:$0xff]
  %v53 = vld [vmem:[%s0 + $0xa0] sm:$0xff]
  %v54 = vld [vmem:[%s0 + $0xa8] sm:$0xff]
  %v55 = vld [vmem:[%s0 + $0xb0] sm:$0xff]
  %v56 = vld [vmem:[%s0 + $0xb8] sm:$0xff]
  %v57 = vld [vmem:[%s0 + $0xc0] sm:$0xff]
  %v58 = vld [vmem:[%s0 + $0xc8] sm:$0xff]
  %v59 = vld [vmem:[%s0 + $0xd0] sm:$0xff]
  %v60 = vld [vmem:[%s0 + $0xd8] sm:$0xff]
  %v61 = vld [vmem:[%s0 + $0xe0] sm:$0xff]
  %v62 = vld [vmem:[%s0 + $0xe8] sm:$0xff]
  %v63 = vld [vmem:[%s0 + $0xf0] sm:$0xff]
  %v64 = vld [vmem:[%s0 + $0xf8] sm:$0xff]
  %v65 = vld [vmem:[%s0 + $0x100] sm:$0xff]
  %v66 = vld [vmem:[%s0 + $0x108] sm:$0xff]
  %v67 = vld [vmem:[%s0 + $0x110] sm:$0xff]
  %v68 = vld [vmem:[%s0 + $0x118] sm:$0xff]
  %v69 = vld [vmem:[%s0 + $0x120] sm:$0xff]
  %v70 = vld [vmem:[%s0 + $0x128] sm:$0xff]
  %v71 = vld [vmem:[%s0 + $0x130] sm:$0xff]
  %v72 = vld [vmem:[%s0 + $0x138] sm:$0xff]
  %v73 = vld [vmem:[%s0 + $0x140] sm:$0xff]
  %v74 = vld [vmem:[%s0 + $0x148] sm:$0xff]
  %v75 = vld [vmem:[%s0 + $0x150] sm:$0xff]
  %v76 = vld [vmem:[%s0 + $0x158] sm:$0xff]
  %v77 = vld [vmem:[%s0 + $0x160] sm:$0xff]
  %v78 = vld [vmem:[%s0 + $0x168] sm:$0xff]
  %v79 = vld [vmem:[%s0 + $0x170] sm:$0xff]
  %v80 = vld [vmem:[%s0 + $0x178] sm:$0xff]
  %v81 = vld [vmem:[%s1] sm:$0xff]
  %v82 = vld [vmem:[%s1 + $0x8] sm:$0xff]
  %v83 = vld [vmem:[%s1 + $0x10] sm:$0xff]
  %v84 = vld [vmem:[%s1 + $0x18] sm:$0xff]
  %v85 = vld [vmem:[%s1 + $0x20] sm:$0xff]
  %v86 = vld [vmem:[%s1 + $0x28] sm:$0xff]
  %v87 = vld [vmem:[%s1 + $0x30] sm:$0xff]
  %v88 = vld [vmem:[%s1 + $0x38] sm:$0xff]
  %v89 = vld [vmem:[%s1 + $0x40] sm:$0xff]
  %v90 = vld [vmem:[%s1 + $0x48] sm:$0xff]
  %v91 = vld [vmem:[%s1 + $0x50] sm:$0xff]
  %v92 = vld [vmem:[%s1 + $0x58] sm:$0xff]
  %v93 = vld [vmem:[%s1 + $0x60] sm:$0xff]
  %v94 = vld [vmem:[%s1 + $0x68] sm:$0xff]
  %v95 = vld [vmem:[%s1 + $0x70] sm:$0xff]
  %v96 = vld [vmem:[%s1 + $0x78] sm:$0xff]
  %v97 = vld [vmem:[%s1 + $0x80] sm:$0xff]
  %v98 = vld [vmem:[%s1 + $0x88] sm:$0x33]
  %v99 = vld [vmem:[%s2] sm:$0x3]
  %v101 = vlaneseq
  %v102 = vshrl.u32 %v101, 7
  %v103 = vsub.s32 0, %v102
  %v104 = vrot.slane %v99, %v103
  %v105 = vlaneseq
  %v106 = vshrl.u32 %v105, 7
  %v107 = vsub.s32 1, %v106
  %v108 = vrot.slane %v99, %v107
  %v159 = vunpack.c.l.b16 %v33
  %v160 = vunpack.c.h.b16 %v33
  %v161 = vunpack.c.l.b16 %v34
  %v162 = vunpack.c.h.b16 %v34
  %v163 = vunpack.c.l.b16 %v35
  %v164 = vunpack.c.h.b16 %v35
  %v165 = vunpack.c.l.b16 %v36
  %v166 = vunpack.c.h.b16 %v36
  %v167 = vunpack.c.l.b16 %v37
  %v168 = vunpack.c.h.b16 %v37
  %v169 = vunpack.c.l.b16 %v38
  %v170 = vunpack.c.h.b16 %v38
  %v171 = vunpack.c.l.b16 %v39
  %v172 = vunpack.c.h.b16 %v39
  %v173 = vunpack.c.l.b16 %v40
  %v174 = vunpack.c.h.b16 %v40
  %v175 = vunpack.c.l.b16 %v41
  %v176 = vunpack.c.h.b16 %v41
  %v177 = vunpack.c.l.b16 %v42
  %v178 = vunpack.c.h.b16 %v42
  %v179 = vunpack.c.l.b16 %v43
  %v180 = vunpack.c.h.b16 %v43
  %v181 = vunpack.c.l.b16 %v44
  %v182 = vunpack.c.h.b16 %v44
  %v183 = vunpack.c.l.b16 %v45
  %v184 = vunpack.c.h.b16 %v45
  %v185 = vunpack.c.l.b16 %v46
  %v186 = vunpack.c.h.b16 %v46
  %v187 = vunpack.c.l.b16 %v47
  %v188 = vunpack.c.h.b16 %v47
  %v189 = vunpack.c.l.b16 %v48
  %v190 = vunpack.c.h.b16 %v48
  %v191 = vunpack.c.l.b16 %v49
  %v192 = vunpack.c.h.b16 %v49
  %v193 = vunpack.c.l.b16 %v50
  %v194 = vunpack.c.h.b16 %v50
  %v195 = vunpack.c.l.b16 %v51
  %v196 = vunpack.c.h.b16 %v51
  %v197 = vunpack.c.l.b16 %v52
  %v198 = vunpack.c.h.b16 %v52
  %v199 = vunpack.c.l.b16 %v53
  %v200 = vunpack.c.h.b16 %v53
  %v201 = vunpack.c.l.b16 %v54
  %v202 = vunpack.c.h.b16 %v54
  %v203 = vunpack.c.l.b16 %v55
  %v204 = vunpack.c.h.b16 %v55
  %v205 = vunpack.c.l.b16 %v56
  %v206 = vunpack.c.h.b16 %v56
  %v207 = vunpack.c.l.b16 %v57
  %v208 = vunpack.c.h.b16 %v57
  %v209 = vunpack.c.l.b16 %v58
  %v210 = vunpack.c.h.b16 %v58
  %v211 = vunpack.c.l.b16 %v59
  %v212 = vunpack.c.h.b16 %v59
  %v213 = vunpack.c.l.b16 %v60
  %v214 = vunpack.c.h.b16 %v60
  %v215 = vunpack.c.l.b16 %v61
  %v216 = vunpack.c.h.b16 %v61
  %v217 = vunpack.c.l.b16 %v62
  %v218 = vunpack.c.h.b16 %v62
  %v219 = vunpack.c.l.b16 %v63
  %v220 = vunpack.c.h.b16 %v63
  %v221 = vunpack.c.l.b16 %v64
  %v222 = vunpack.c.h.b16 %v64
  %v223 = vunpack.c.l.b16 %v65
  %v224 = vunpack.c.h.b16 %v65
  %v225 = vunpack.c.l.b16 %v66
  %v226 = vunpack.c.h.b16 %v66
  %v227 = vunpack.c.l.b16 %v67
  %v228 = vunpack.c.h.b16 %v67
  %v229 = vunpack.c.l.b16 %v68
  %v230 = vunpack.c.h.b16 %v68
  %v231 = vunpack.c.l.b16 %v69
  %v232 = vunpack.c.h.b16 %v69
  %v233 = vunpack.c.l.b16 %v70
  %v234 = vunpack.c.h.b16 %v70
  %v235 = vunpack.c.l.b16 %v71
  %v236 = vunpack.c.h.b16 %v71
  %v237 = vunpack.c.l.b16 %v72
  %v238 = vunpack.c.h.b16 %v72
  %v239 = vunpack.c.l.b16 %v73
  %v240 = vunpack.c.h.b16 %v73
  %v241 = vunpack.c.l.b16 %v74
  %v242 = vunpack.c.h.b16 %v74
  %v243 = vunpack.c.l.b16 %v75
  %v244 = vunpack.c.h.b16 %v75
  %v245 = vunpack.c.l.b16 %v76
  %v246 = vunpack.c.h.b16 %v76
  %v247 = vunpack.c.l.b16 %v77
  %v248 = vunpack.c.h.b16 %v77
  %v249 = vunpack.c.l.b16 %v78
  %v250 = vunpack.c.h.b16 %v78
  %v251 = vunpack.c.l.b16 %v79
  %v252 = vunpack.c.h.b16 %v79
  %v253 = vunpack.c.l.b16 %v80
  %v254 = vunpack.c.h.b16 %v80
  %v255 = vpack.c.b16 %v161, %v159
  %v256 = vpack.c.b16 %v162, %v160
  %v257 = vpack.c.b16 %v165, %v163
  %v258 = vpack.c.b16 %v166, %v164
  %v259 = vpack.c.b16 %v169, %v167
  %v260 = vpack.c.b16 %v170, %v168
  %v261 = vpack.c.b16 %v173, %v171
  %v262 = vpack.c.b16 %v174, %v172
  %v263 = vpack.c.b16 %v177, %v175
  %v264 = vpack.c.b16 %v178, %v176
  %v265 = vpack.c.b16 %v181, %v179
  %v266 = vpack.c.b16 %v182, %v180
  %v267 = vpack.c.b16 %v185, %v183
  %v268 = vpack.c.b16 %v186, %v184
  %v269 = vpack.c.b16 %v189, %v187
  %v270 = vpack.c.b16 %v190, %v188
  %v271 = vpack.c.b16 %v193, %v191
  %v272 = vpack.c.b16 %v194, %v192
  %v273 = vpack.c.b16 %v197, %v195
  %v274 = vpack.c.b16 %v198, %v196
  %v275 = vpack.c.b16 %v201, %v199
  %v276 = vpack.c.b16 %v202, %v200
  %v277 = vpack.c.b16 %v205, %v203
  %v278 = vpack.c.b16 %v206, %v204
  %v279 = vpack.c.b16 %v209, %v207
  %v280 = vpack.c.b16 %v210, %v208
  %v281 = vpack.c.b16 %v213, %v211
  %v282 = vpack.c.b16 %v214, %v212
  %v283 = vpack.c.b16 %v217, %v215
  %v284 = vpack.c.b16 %v218, %v216
  %v285 = vpack.c.b16 %v221, %v219
  %v286 = vpack.c.b16 %v222, %v220
  %v287 = vpack.c.b16 %v225, %v223
  %v288 = vpack.c.b16 %v226, %v224
  %v289 = vpack.c.b16 %v229, %v227
  %v290 = vpack.c.b16 %v230, %v228
  %v291 = vpack.c.b16 %v233, %v231
  %v292 = vpack.c.b16 %v234, %v232
  %v293 = vpack.c.b16 %v237, %v235
  %v294 = vpack.c.b16 %v238, %v236
  %v295 = vpack.c.b16 %v241, %v239
  %v296 = vpack.c.b16 %v242, %v240
  %v297 = vpack.c.b16 %v245, %v243
  %v298 = vpack.c.b16 %v246, %v244
  %v299 = vpack.c.b16 %v249, %v247
  %v300 = vpack.c.b16 %v250, %v248
  %v301 = vpack.c.b16 %v253, %v251
  %v302 = vpack.c.b16 %v254, %v252
  %v345 = vunpack.c.l.b16 %v81
  %v346 = vunpack.c.h.b16 %v81
  %v347 = vunpack.c.l.b16 %v82
  %v348 = vunpack.c.h.b16 %v82
  %v349 = vunpack.c.l.b16 %v83
  %v350 = vunpack.c.h.b16 %v83
  %v351 = vunpack.c.l.b16 %v84
  %v352 = vunpack.c.h.b16 %v84
  %v353 = vunpack.c.l.b16 %v85
  %v354 = vunpack.c.h.b16 %v85
  %v355 = vunpack.c.l.b16 %v86
  %v356 = vunpack.c.h.b16 %v86
  %v357 = vunpack.c.l.b16 %v87
  %v358 = vunpack.c.h.b16 %v87
  %v359 = vunpack.c.l.b16 %v88
  %v360 = vunpack.c.h.b16 %v88
  %v361 = vunpack.c.l.b16 %v89
  %v362 = vunpack.c.h.b16 %v89
  %v363 = vunpack.c.l.b16 %v90
  %v364 = vunpack.c.h.b16 %v90
  %v365 = vunpack.c.l.b16 %v91
  %v366 = vunpack.c.h.b16 %v91
  %v367 = vunpack.c.l.b16 %v92
  %v368 = vunpack.c.h.b16 %v92
  %v369 = vunpack.c.l.b16 %v93
  %v370 = vunpack.c.h.b16 %v93
  %v371 = vunpack.c.l.b16 %v94
  %v372 = vunpack.c.h.b16 %v94
  %v373 = vunpack.c.l.b16 %v95
  %v374 = vunpack.c.h.b16 %v95
  %v375 = vunpack.c.l.b16 %v96
  %v376 = vunpack.c.h.b16 %v96
  %v377 = vunpack.c.l.b16 %v97
  %v378 = vunpack.c.h.b16 %v97
  %v379 = vunpack.c.l.b16 %v98
  %v380 = vunpack.c.h.b16 %v98
  %v381 = vpack.c.b16 %v347, %v345
  %v382 = vpack.c.b16 %v348, %v346
  %v383 = vpack.c.b16 %v351, %v349
  %v384 = vpack.c.b16 %v352, %v350
  %v385 = vpack.c.b16 %v355, %v353
  %v386 = vpack.c.b16 %v356, %v354
  %v387 = vpack.c.b16 %v359, %v357
  %v388 = vpack.c.b16 %v360, %v358
  %v389 = vpack.c.b16 %v363, %v361
  %v390 = vpack.c.b16 %v364, %v362
  %v391 = vpack.c.b16 %v367, %v365
  %v392 = vpack.c.b16 %v368, %v366
  %v393 = vpack.c.b16 %v371, %v369
  %v394 = vpack.c.b16 %v372, %v370
  %v395 = vpack.c.b16 %v375, %v373
  %v396 = vpack.c.b16 %v376, %v374
  %v397 = vpack.c.b16 %v379, %v377
  %v398 = vpack.c.b16 %v380, %v378
  %vm415 = vcmask 97280
  %v417 = vsel %vm415, %v256, 0
  %v420 = vsel %vm415, %v258, 0
  %v423 = vsel %vm415, %v260, 0
  %v426 = vsel %vm415, %v262, 0
  %v429 = vsel %vm415, %v264, 0
  %v432 = vsel %vm415, %v266, 0
  %v435 = vsel %vm415, %v268, 0
  %v438 = vsel %vm415, %v270, 0
  %v441 = vsel %vm415, %v272, 0
  %v444 = vsel %vm415, %v274, 0
  %v447 = vsel %vm415, %v276, 0
  %v450 = vsel %vm415, %v278, 0
  %v453 = vsel %vm415, %v280, 0
  %v456 = vsel %vm415, %v282, 0
  %v459 = vsel %vm415, %v284, 0
  %v462 = vsel %vm415, %v286, 0
  %v465 = vsel %vm415, %v288, 0
  %v468 = vsel %vm415, %v290, 0
  %v471 = vsel %vm415, %v292, 0
  %v474 = vsel %vm415, %v294, 0
  %v477 = vsel %vm415, %v296, 0
  %v480 = vsel %vm415, %v298, 0
  %v483 = vsel %vm415, %v300, 0
  %v486 = vsel %vm415, %v302, 0
  %vm488 = vcmask 1045504
  %v490 = vsel %vm488, %v397, 0
  %v493 = vsel %vm488, %v398, 0
  %495 = vmatprep.subr.bf16.mxu0 %v382
  %496 = vmatpush1.bf16.msra.mxu0 %v381
  %497 = vmatprep.subr.bf16.mxu0 %v384
  %498 = vmatpush1.bf16.msra.mxu0 %v383
  %499 = vmatprep.subr.bf16.mxu0 %v386
  %500 = vmatpush1.bf16.msra.mxu0 %v385
  %501 = vmatprep.subr.bf16.mxu0 %v388
  %502 = vmatpush1.bf16.msra.mxu0 %v387
  %503 = vmatprep.subr.bf16.mxu0 %v390
  %504 = vmatpush1.bf16.msra.mxu0 %v389
  %505 = vmatprep.subr.bf16.mxu0 %v392
  %506 = vmatpush1.bf16.msra.mxu0 %v391
  %507 = vmatprep.subr.bf16.mxu0 %v394
  %508 = vmatpush1.bf16.msra.mxu0 %v393
  %509 = vmatprep.subr.bf16.mxu0 %v396
  %510 = vmatpush1.bf16.msra.mxu0 %v395
  %511 = vmatprep.subr.bf16.mxu0 %v493
  %512 = vmatpush1.bf16.msra.mxu0 %v490
  %513 = vmatprep.subr.bf16.mxu0 0
  %514 = vmatpush1.bf16.msra.mxu0 0
  %515 = vmatprep.subr.bf16.mxu0 0
  %516 = vmatpush1.bf16.msra.mxu0 0
  %517 = vmatprep.subr.bf16.mxu0 0
  %518 = vmatpush1.bf16.msra.mxu0 0
  %519 = vmatprep.subr.bf16.mxu0 0
  %520 = vmatpush1.bf16.msra.mxu0 0
  %521 = vmatprep.subr.bf16.mxu0 0
  %522 = vmatpush1.bf16.msra.mxu0 0
  %523 = vmatprep.subr.bf16.mxu0 0
  %524 = vmatpush1.bf16.msra.mxu0 0
  %525 = vmatprep.subr.bf16.mxu0 0
  %526 = vmatpush1.bf16.msra.mxu0 0
  %527 = vmatprep.mubr.bf16.mxu0 %v417
  %528 = vmatmul.mubr.bf16.gmra.mrb[0].mxu0 %v255
  %v529 = vpop.f32.mrb[0].mxu0
  %v530 = vadd.f32 %v104, %v529
  %v531 = vpop.f32.mrb[0].mxu0
  %v532 = vadd.f32 %v108, %v531
  %v533 = vpop.f32.mrb[0].mxu0
  %v534 = vadd.f32 %v104, %v533
  %v535 = vpop.f32.mrb[0].mxu0
  %v536 = vadd.f32 %v108, %v535
  %537 = vmatprep.mubr.bf16.mxu0 %v420
  %538 = vmatmul.mubr.bf16.gmra.mrb[0].mxu0 %v257
  %v539 = vpop.f32.mrb[0].mxu0
  %v540 = vadd.f32 %v104, %v539
  %v541 = vpop.f32.mrb[0].mxu0
  %v542 = vadd.f32 %v108, %v541
  %v543 = vpop.f32.mrb[0].mxu0
  %v544 = vadd.f32 %v104, %v543
  %v545 = vpop.f32.mrb[0].mxu0
  %v546 = vadd.f32 %v108, %v545
  %547 = vmatprep.mubr.bf16.mxu0 %v423
  %548 = vmatmul.mubr.bf16.gmra.mrb[0].mxu0 %v259
  %v549 = vpop.f32.mrb[0].mxu0
  %v550 = vadd.f32 %v104, %v549
  %v551 = vpop.f32.mrb[0].mxu0
  %v552 = vadd.f32 %v108, %v551
  %v553 = vpop.f32.mrb[0].mxu0
  %v554 = vadd.f32 %v104, %v553
  %v555 = vpop.f32.mrb[0].mxu0
  %v556 = vadd.f32 %v108, %v555
  %557 = vmatprep.mubr.bf16.mxu0 %v426
  %558 = vmatmul.mubr.bf16.gmra.mrb[0].mxu0 %v261
  %v559 = vpop.f32.mrb[0].mxu0
  %v560 = vadd.f32 %v104, %v559
  %v561 = vpop.f32.mrb[0].mxu0
  %v562 = vadd.f32 %v108, %v561
  %v563 = vpop.f32.mrb[0].mxu0
  %v564 = vadd.f32 %v104, %v563
  %v565 = vpop.f32.mrb[0].mxu0
  %v566 = vadd.f32 %v108, %v565
  %567 = vmatprep.mubr.bf16.mxu0 %v429
  %568 = vmatmul.mubr.bf16.gmra.mrb[0].mxu0 %v263
  %v569 = vpop.f32.mrb[0].mxu0
  %v570 = vadd.f32 %v104, %v569
  %v571 = vpop.f32.mrb[0].mxu0
  %v572 = vadd.f32 %v108, %v571
  %v573 = vpop.f32.mrb[0].mxu0
  %v574 = vadd.f32 %v104, %v573
  %v575 = vpop.f32.mrb[0].mxu0
  %v576 = vadd.f32 %v108, %v575
  %577 = vmatprep.mubr.bf16.mxu0 %v432
  %578 = vmatmul.mubr.bf16.gmra.mrb[0].mxu0 %v265
  %v579 = vpop.f32.mrb[0].mxu0
  %v580 = vadd.f32 %v104, %v579
  %v581 = vpop.f32.mrb[0].mxu0
  %v582 = vadd.f32 %v108, %v581
  %v583 = vpop.f32.mrb[0].mxu0
  %v584 = vadd.f32 %v104, %v583
  %v585 = vpop.f32.mrb[0].mxu0
  %v586 = vadd.f32 %v108, %v585
  %587 = vmatprep.mubr.bf16.mxu0 %v435
  %588 = vmatmul.mubr.bf16.gmra.mrb[0].mxu0 %v267
  %v589 = vpop.f32.mrb[0].mxu0
  %v590 = vadd.f32 %v104, %v589
  %v591 = vpop.f32.mrb[0].mxu0
  %v592 = vadd.f32 %v108, %v591
  %v593 = vpop.f32.mrb[0].mxu0
  %v594 = vadd.f32 %v104, %v593
  %v595 = vpop.f32.mrb[0].mxu0
  %v596 = vadd.f32 %v108, %v595
  %597 = vmatprep.mubr.bf16.mxu0 %v438
  %598 = vmatmul.mubr.bf16.gmra.mrb[0].mxu0 %v269
  %v599 = vpop.f32.mrb[0].mxu0
  %v600 = vadd.f32 %v104, %v599
  %v601 = vpop.f32.mrb[0].mxu0
  %v602 = vadd.f32 %v108, %v601
  %v603 = vpop.f32.mrb[0].mxu0
  %v604 = vadd.f32 %v104, %v603
  %v605 = vpop.f32.mrb[0].mxu0
  %v606 = vadd.f32 %v108, %v605
  %607 = vmatprep.mubr.bf16.mxu0 %v441
  %608 = vmatmul.mubr.bf16.gmra.mrb[0].mxu0 %v271
  %v609 = vpop.f32.mrb[0].mxu0
  %v610 = vadd.f32 %v104, %v609
  %v611 = vpop.f32.mrb[0].mxu0
  %v612 = vadd.f32 %v108, %v611
  %v613 = vpop.f32.mrb[0].mxu0
  %v614 = vadd.f32 %v104, %v613
  %v615 = vpop.f32.mrb[0].mxu0
  %v616 = vadd.f32 %v108, %v615
  %617 = vmatprep.mubr.bf16.mxu0 %v444
  %618 = vmatmul.mubr.bf16.gmra.mrb[0].mxu0 %v273
  %v619 = vpop.f32.mrb[0].mxu0
  %v620 = vadd.f32 %v104, %v619
  %v621 = vpop.f32.mrb[0].mxu0
  %v622 = vadd.f32 %v108, %v621
  %v623 = vpop.f32.mrb[0].mxu0
  %v624 = vadd.f32 %v104, %v623
  %v625 = vpop.f32.mrb[0].mxu0
  %v626 = vadd.f32 %v108, %v625
  %627 = vmatprep.mubr.bf16.mxu0 %v447
  %628 = vmatmul.mubr.bf16.gmra.mrb[0].mxu0 %v275
  %v629 = vpop.f32.mrb[0].mxu0
  %v630 = vadd.f32 %v104, %v629
  %v631 = vpop.f32.mrb[0].mxu0
  %v632 = vadd.f32 %v108, %v631
  %v633 = vpop.f32.mrb[0].mxu0
  %v634 = vadd.f32 %v104, %v633
  %v635 = vpop.f32.mrb[0].mxu0
  %v636 = vadd.f32 %v108, %v635
  %637 = vmatprep.mubr.bf16.mxu0 %v450
  %638 = vmatmul.mubr.bf16.gmra.mrb[0].mxu0 %v277
  %v639 = vpop.f32.mrb[0].mxu0
  %v640 = vadd.f32 %v104, %v639
  %v641 = vpop.f32.mrb[0].mxu0
  %v642 = vadd.f32 %v108, %v641
  %v643 = vpop.f32.mrb[0].mxu0
  %v644 = vadd.f32 %v104, %v643
  %v645 = vpop.f32.mrb[0].mxu0
  %v646 = vadd.f32 %v108, %v645
  %647 = vmatprep.mubr.bf16.mxu0 %v453
  %648 = vmatmul.mubr.bf16.gmra.mrb[0].mxu0 %v279
  %v649 = vpop.f32.mrb[0].mxu0
  %v650 = vadd.f32 %v104, %v649
  %v651 = vpop.f32.mrb[0].mxu0
  %v652 = vadd.f32 %v108, %v651
  %v653 = vpop.f32.mrb[0].mxu0
  %v654 = vadd.f32 %v104, %v653
  %v655 = vpop.f32.mrb[0].mxu0
  %v656 = vadd.f32 %v108, %v655
  %657 = vmatprep.mubr.bf16.mxu0 %v456
  %658 = vmatmul.mubr.bf16.gmra.mrb[0].mxu0 %v281
  %v659 = vpop.f32.mrb[0].mxu0
  %v660 = vadd.f32 %v104, %v659
  %v661 = vpop.f32.mrb[0].mxu0
  %v662 = vadd.f32 %v108, %v661
  %v663 = vpop.f32.mrb[0].mxu0
  %v664 = vadd.f32 %v104, %v663
  %v665 = vpop.f32.mrb[0].mxu0
  %v666 = vadd.f32 %v108, %v665
  %667 = vmatprep.mubr.bf16.mxu0 %v459
  %668 = vmatmul.mubr.bf16.gmra.mrb[0].mxu0 %v283
  %v669 = vpop.f32.mrb[0].mxu0
  %v670 = vadd.f32 %v104, %v669
  %v671 = vpop.f32.mrb[0].mxu0
  %v672 = vadd.f32 %v108, %v671
  %v673 = vpop.f32.mrb[0].mxu0
  %v674 = vadd.f32 %v104, %v673
  %v675 = vpop.f32.mrb[0].mxu0
  %v676 = vadd.f32 %v108, %v675
  %677 = vmatprep.mubr.bf16.mxu0 %v462
  %678 = vmatmul.mubr.bf16.gmra.mrb[0].mxu0 %v285
  %v679 = vpop.f32.mrb[0].mxu0
  %v680 = vadd.f32 %v104, %v679
  %v681 = vpop.f32.mrb[0].mxu0
  %v682 = vadd.f32 %v108, %v681
  %v683 = vpop.f32.mrb[0].mxu0
  %v684 = vadd.f32 %v104, %v683
  %v685 = vpop.f32.mrb[0].mxu0
  %v686 = vadd.f32 %v108, %v685
  %687 = vmatprep.mubr.bf16.mxu0 %v465
  %688 = vmatmul.mubr.bf16.gmra.mrb[0].mxu0 %v287
  %v689 = vpop.f32.mrb[0].mxu0
  %v690 = vadd.f32 %v104, %v689
  %v691 = vpop.f32.mrb[0].mxu0
  %v692 = vadd.f32 %v108, %v691
  %v693 = vpop.f32.mrb[0].mxu0
  %v694 = vadd.f32 %v104, %v693
  %v695 = vpop.f32.mrb[0].mxu0
  %v696 = vadd.f32 %v108, %v695
  %697 = vmatprep.mubr.bf16.mxu0 %v468
  %698 = vmatmul.mubr.bf16.gmra.mrb[0].mxu0 %v289
  %v699 = vpop.f32.mrb[0].mxu0
  %v700 = vadd.f32 %v104, %v699
  %v701 = vpop.f32.mrb[0].mxu0
  %v702 = vadd.f32 %v108, %v701
  %v703 = vpop.f32.mrb[0].mxu0
  %v704 = vadd.f32 %v104, %v703
  %v705 = vpop.f32.mrb[0].mxu0
  %v706 = vadd.f32 %v108, %v705
  %707 = vmatprep.mubr.bf16.mxu0 %v471
  %708 = vmatmul.mubr.bf16.gmra.mrb[0].mxu0 %v291
  %v709 = vpop.f32.mrb[0].mxu0
  %v710 = vadd.f32 %v104, %v709
  %v711 = vpop.f32.mrb[0].mxu0
  %v712 = vadd.f32 %v108, %v711
  %v713 = vpop.f32.mrb[0].mxu0
  %v714 = vadd.f32 %v104, %v713
  %v715 = vpop.f32.mrb[0].mxu0
  %v716 = vadd.f32 %v108, %v715
  %717 = vmatprep.mubr.bf16.mxu0 %v474
  %718 = vmatmul.mubr.bf16.gmra.mrb[0].mxu0 %v293
  %v719 = vpop.f32.mrb[0].mxu0
  %v720 = vadd.f32 %v104, %v719
  %v721 = vpop.f32.mrb[0].mxu0
  %v722 = vadd.f32 %v108, %v721
  %v723 = vpop.f32.mrb[0].mxu0
  %v724 = vadd.f32 %v104, %v723
  %v725 = vpop.f32.mrb[0].mxu0
  %v726 = vadd.f32 %v108, %v725
  %727 = vmatprep.mubr.bf16.mxu0 %v477
  %728 = vmatmul.mubr.bf16.gmra.mrb[0].mxu0 %v295
  %v729 = vpop.f32.mrb[0].mxu0
  %v730 = vadd.f32 %v104, %v729
  %v731 = vpop.f32.mrb[0].mxu0
  %v732 = vadd.f32 %v108, %v731
  %v733 = vpop.f32.mrb[0].mxu0
  %v734 = vadd.f32 %v104, %v733
  %v735 = vpop.f32.mrb[0].mxu0
  %v736 = vadd.f32 %v108, %v735
  %737 = vmatprep.mubr.bf16.mxu0 %v480
  %738 = vmatmul.mubr.bf16.gmra.mrb[0].mxu0 %v297
  %v739 = vpop.f32.mrb[0].mxu0
  %v740 = vadd.f32 %v104, %v739
  %v741 = vpop.f32.mrb[0].mxu0
  %v742 = vadd.f32 %v108, %v741
  %v743 = vpop.f32.mrb[0].mxu0
  %v744 = vadd.f32 %v104, %v743
  %v745 = vpop.f32.mrb[0].mxu0
  %v746 = vadd.f32 %v108, %v745
  %747 = vmatprep.mubr.bf16.mxu0 %v483
  %748 = vmatmul.mubr.bf16.gmra.mrb[0].mxu0 %v299
  %v749 = vpop.f32.mrb[0].mxu0
  %v750 = vadd.f32 %v104, %v749
  %v751 = vpop.f32.mrb[0].mxu0
  %v752 = vadd.f32 %v108, %v751
  %v753 = vpop.f32.mrb[0].mxu0
  %v754 = vadd.f32 %v104, %v753
  %v755 = vpop.f32.mrb[0].mxu0
  %v756 = vadd.f32 %v108, %v755
  %757 = vmatprep.mubr.bf16.mxu0 %v486
  %758 = vmatmul.mubr.bf16.gmra.mrb[0].mxu0 %v301
  %v759 = vpop.f32.mrb[0].mxu0
  %v760 = vadd.f32 %v104, %v759
  %v761 = vpop.f32.mrb[0].mxu0
  %v762 = vadd.f32 %v108, %v761
  %v763 = vpop.f32.mrb[0].mxu0
  %v764 = vadd.f32 %v104, %v763
  %v765 = vpop.f32.mrb[0].mxu0
  %v766 = vadd.f32 %v108, %v765
  %767 = vdwg.mxu0
  %v768 = vpack.c.bf16 %v534, %v530
  %v769 = vpack.c.bf16 %v536, %v532
  %v770 = vpack.c.bf16 %v544, %v540
  %v771 = vpack.c.bf16 %v546, %v542
  %v772 = vpack.c.bf16 %v554, %v550
  %v773 = vpack.c.bf16 %v556, %v552
  %v774 = vpack.c.bf16 %v564, %v560
  %v775 = vpack.c.bf16 %v566, %v562
  %v776 = vpack.c.bf16 %v574, %v570
  %v777 = vpack.c.bf16 %v576, %v572
  %v778 = vpack.c.bf16 %v584, %v580
  %v779 = vpack.c.bf16 %v586, %v582
  %v780 = vpack.c.bf16 %v594, %v590
  %v781 = vpack.c.bf16 %v596, %v592
  %v782 = vpack.c.bf16 %v604, %v600
  %v783 = vpack.c.bf16 %v606, %v602
  %v784 = vpack.c.bf16 %v614, %v610
  %v785 = vpack.c.bf16 %v616, %v612
  %v786 = vpack.c.bf16 %v624, %v620
  %v787 = vpack.c.bf16 %v626, %v622
  %v788 = vpack.c.bf16 %v634, %v630
  %v789 = vpack.c.bf16 %v636, %v632
  %v790 = vpack.c.bf16 %v644, %v640
  %v791 = vpack.c.bf16 %v646, %v642
  %v792 = vpack.c.bf16 %v654, %v650
  %v793 = vpack.c.bf16 %v656, %v652
  %v794 = vpack.c.bf16 %v664, %v660
  %v795 = vpack.c.bf16 %v666, %v662
  %v796 = vpack.c.bf16 %v674, %v670
  %v797 = vpack.c.bf16 %v676, %v672
  %v798 = vpack.c.bf16 %v684, %v680
  %v799 = vpack.c.bf16 %v686, %v682
  %v800 = vpack.c.bf16 %v694, %v690
  %v801 = vpack.c.bf16 %v696, %v692
  %v802 = vpack.c.bf16 %v704, %v700
  %v803 = vpack.c.bf16 %v706, %v702
  %v804 = vpack.c.bf16 %v714, %v710
  %v805 = vpack.c.bf16 %v716, %v712
  %v806 = vpack.c.bf16 %v724, %v720
  %v807 = vpack.c.bf16 %v726, %v722
  %v808 = vpack.c.bf16 %v734, %v730
  %v809 = vpack.c.bf16 %v736, %v732
  %v810 = vpack.c.bf16 %v744, %v740
  %v811 = vpack.c.bf16 %v746, %v742
  %v812 = vpack.c.bf16 %v754, %v750
  %v813 = vpack.c.bf16 %v756, %v752
  %v814 = vpack.c.bf16 %v764, %v760
  %v815 = vpack.c.bf16 %v766, %v762
  %816 = vst [vmem:[#allocation2] sm:$0xff] %v768
  %817 = vst [vmem:[#allocation2 + $0x8] sm:$0xff] %v769
  %818 = vst [vmem:[#allocation2 + $0x10] sm:$0xff] %v770
  %819 = vst [vmem:[#allocation2 + $0x18] sm:$0xff] %v771
  %820 = vst [vmem:[#allocation2 + $0x20] sm:$0xff] %v772
  %821 = vst [vmem:[#allocation2 + $0x28] sm:$0xff] %v773
  %822 = vst [vmem:[#allocation2 + $0x30] sm:$0xff] %v774
  %823 = vst [vmem:[#allocation2 + $0x38] sm:$0xff] %v775
  %824 = vst [vmem:[#allocation2 + $0x40] sm:$0xff] %v776
  %825 = vst [vmem:[#allocation2 + $0x48] sm:$0xff] %v777
  %826 = vst [vmem:[#allocation2 + $0x50] sm:$0xff] %v778
  %827 = vst [vmem:[#allocation2 + $0x58] sm:$0xff] %v779
  %828 = vst [vmem:[#allocation2 + $0x60] sm:$0xff] %v780
  %829 = vst [vmem:[#allocation2 + $0x68] sm:$0xff] %v781
  %830 = vst [vmem:[#allocation2 + $0x70] sm:$0xff] %v782
  %831 = vst [vmem:[#allocation2 + $0x78] sm:$0xff] %v783
  %832 = vst [vmem:[#allocation2 + $0x80] sm:$0xff] %v784
  %833 = vst [vmem:[#allocation2 + $0x88] sm:$0xff] %v785
  %834 = vst [vmem:[#allocation2 + $0x90] sm:$0xff] %v786
  %835 = vst [vmem:[#allocation2 + $0x98] sm:$0xff] %v787
  %836 = vst [vmem:[#allocation2 + $0xa0] sm:$0xff] %v788
  %837 = vst [vmem:[#allocation2 + $0xa8] sm:$0xff] %v789
  %838 = vst [vmem:[#allocation2 + $0xb0] sm:$0xff] %v790
  %839 = vst [vmem:[#allocation2 + $0xb8] sm:$0xff] %v791
  %840 = vst [vmem:[#allocation2 + $0xc0] sm:$0xff] %v792
  %841 = vst [vmem:[#allocation2 + $0xc8] sm:$0xff] %v793
  %842 = vst [vmem:[#allocation2 + $0xd0] sm:$0xff] %v794
  %843 = vst [vmem:[#allocation2 + $0xd8] sm:$0xff] %v795
  %844 = vst [vmem:[#allocation2 + $0xe0] sm:$0xff] %v796
  %845 = vst [vmem:[#allocation2 + $0xe8] sm:$0xff] %v797
  %846 = vst [vmem:[#allocation2 + $0xf0] sm:$0xff] %v798
  %847 = vst [vmem:[#allocation2 + $0xf8] sm:$0xff] %v799
  %848 = vst [vmem:[#allocation2 + $0x100] sm:$0xff] %v800
  %849 = vst [vmem:[#allocation2 + $0x108] sm:$0xff] %v801
  %850 = vst [vmem:[#allocation2 + $0x110] sm:$0xff] %v802
  %851 = vst [vmem:[#allocation2 + $0x118] sm:$0xff] %v803
  %852 = vst [vmem:[#allocation2 + $0x120] sm:$0xff] %v804
  %853 = vst [vmem:[#allocation2 + $0x128] sm:$0xff] %v805
  %854 = vst [vmem:[#allocation2 + $0x130] sm:$0xff] %v806
  %855 = vst [vmem:[#allocation2 + $0x138] sm:$0xff] %v807
  %856 = vst [vmem:[#allocation2 + $0x140] sm:$0xff] %v808
  %857 = vst [vmem:[#allocation2 + $0x148] sm:$0xff] %v809
  %858 = vst [vmem:[#allocation2 + $0x150] sm:$0xff] %v810
  %859 = vst [vmem:[#allocation2 + $0x158] sm:$0xff] %v811
  %860 = vst [vmem:[#allocation2 + $0x160] sm:$0xff] %v812
  %861 = vst [vmem:[#allocation2 + $0x168] sm:$0xff] %v813
  %862 = vst [vmem:[#allocation2 + $0x170] sm:$0xff] %v814
  %863 = vst [vmem:[#allocation2 + $0x178] sm:$0xff] %v815
  %v864 = vld [vmem:[#allocation2] sm:$0xff]
  %v865 = vld [vmem:[#allocation2 + $0x8] sm:$0xff]
  %v866 = vld [vmem:[#allocation2 + $0x10] sm:$0xff]
  %v867 = vld [vmem:[#allocation2 + $0x18] sm:$0xff]
  %v868 = vmax.bf16 %v864, %v866
  %v869 = vmax.bf16 %v865, %v867
  %v870 = vmax.bf16 %v868, %v869
  %v871 = vmax.bf16 %v870, 0
  %872 = vst [vmem:[#allocation3] sm:$0xff] %v871
  %v873 = vld [vmem:[#allocation2 + $0x20] sm:$0xff]
  %v874 = vld [vmem:[#allocation2 + $0x28] sm:$0xff]
  %v875 = vld [vmem:[#allocation2 + $0x30] sm:$0xff]
  %v876 = vld [vmem:[#allocation2 + $0x38] sm:$0xff]
  %v877 = vmax.bf16 %v873, %v875
  %v878 = vmax.bf16 %v874, %v876
  %v879 = vmax.bf16 %v877, %v878
  %v880 = vmax.bf16 %v879, 0
  %881 = vst [vmem:[#allocation3 + $0x8] sm:$0xff] %v880
  %v882 = vld [vmem:[#allocation2 + $0x40] sm:$0xff]
  %v883 = vld [vmem:[#allocation2 + $0x48] sm:$0xff]
  %v884 = vld [vmem:[#allocation2 + $0x50] sm:$0xff]
  %v885 = vld [vmem:[#allocation2 + $0x58] sm:$0xff]
  %v886 = vmax.bf16 %v882, %v884
  %v887 = vmax.bf16 %v883, %v885
  %v888 = vmax.bf16 %v886, %v887
  %v889 = vmax.bf16 %v888, 0
  %890 = vst [vmem:[#allocation3 + $0x10] sm:$0xff] %v889
  %v891 = vld [vmem:[#allocation2 + $0x60] sm:$0xff]
  %v892 = vld [vmem:[#allocation2 + $0x68] sm:$0xff]
  %v893 = vld [vmem:[#allocation2 + $0x70] sm:$0xff]
  %v894 = vld [vmem:[#allocation2 + $0x78] sm:$0xff]
  %v895 = vmax.bf16 %v891, %v893
  %v896 = vmax.bf16 %v892, %v894
  %v897 = vmax.bf16 %v895, %v896
  %v898 = vmax.bf16 %v897, 0
  %899 = vst [vmem:[#allocation3 + $0x18] sm:$0xff] %v898
  %v900 = vld [vmem:[#allocation2 + $0x80] sm:$0xff]
  %v901 = vld [vmem:[#allocation2 + $0x88] sm:$0xff]
  %v902 = vld [vmem:[#allocation2 + $0x90] sm:$0xff]
  %v903 = vld [vmem:[#allocation2 + $0x98] sm:$0xff]
  %v904 = vmax.bf16 %v900, %v902
  %v905 = vmax.bf16 %v901, %v903
  %v906 = vmax.bf16 %v904, %v905
  %v907 = vmax.bf16 %v906, 0
  %908 = vst [vmem:[#allocation3 + $0x20] sm:$0xff] %v907
  %v909 = vld [vmem:[#allocation2 + $0xa0] sm:$0xff]
  %v910 = vld [vmem:[#allocation2 + $0xa8] sm:$0xff]
  %v911 = vld [vmem:[#allocation2 + $0xb0] sm:$0xff]
  %v912 = vld [vmem:[#allocation2 + $0xb8] sm:$0xff]
  %v913 = vmax.bf16 %v909, %v911
  %v914 = vmax.bf16 %v910, %v912
  %v915 = vmax.bf16 %v913, %v914
  %v916 = vmax.bf16 %v915, 0
  %917 = vst [vmem:[#allocation3 + $0x28] sm:$0xff] %v916
  %v918 = vld [vmem:[#allocation2 + $0xc0] sm:$0xff]
  %v919 = vld [vmem:[#allocation2 + $0xc8] sm:$0xff]
  %v920 = vld [vmem:[#allocation2 + $0xd0] sm:$0xff]
  %v921 = vld [vmem:[#allocation2 + $0xd8] sm:$0xff]
  %v922 = vmax.bf16 %v918, %v920
  %v923 = vmax.bf16 %v919, %v921
  %v924 = vmax.bf16 %v922, %v923
  %v925 = vmax.bf16 %v924, 0
  %926 = vst [vmem:[#allocation3 + $0x30] sm:$0xff] %v925
  %v927 = vld [vmem:[#allocation2 + $0xe0] sm:$0xff]
  %v928 = vld [vmem:[#allocation2 + $0xe8] sm:$0xff]
  %v929 = vld [vmem:[#allocation2 + $0xf0] sm:$0xff]
  %v930 = vld [vmem:[#allocation2 + $0xf8] sm:$0xff]
  %v931 = vmax.bf16 %v927, %v929
  %v932 = vmax.bf16 %v928, %v930
  %v933 = vmax.bf16 %v931, %v932
  %v934 = vmax.bf16 %v933, 0
  %935 = vst [vmem:[#allocation3 + $0x38] sm:$0xff] %v934
  %v936 = vld [vmem:[#allocation2 + $0x100] sm:$0xff]
  %v937 = vld [vmem:[#allocation2 + $0x108] sm:$0xff]
  %v938 = vld [vmem:[#allocation2 + $0x110] sm:$0xff]
  %v939 = vld [vmem:[#allocation2 + $0x118] sm:$0xff]
  %v940 = vmax.bf16 %v936, %v938
  %v941 = vmax.bf16 %v937, %v939
  %v942 = vmax.bf16 %v940, %v941
  %v943 = vmax.bf16 %v942, 0
  %944 = vst [vmem:[#allocation3 + $0x40] sm:$0xff] %v943
  %v945 = vld [vmem:[#allocation2 + $0x120] sm:$0xff]
  %v946 = vld [vmem:[#allocation2 + $0x128] sm:$0xff]
  %v947 = vld [vmem:[#allocation2 + $0x130] sm:$0xff]
  %v948 = vld [vmem:[#allocation2 + $0x138] sm:$0xff]
  %v949 = vmax.bf16 %v945, %v947
  %v950 = vmax.bf16 %v946, %v948
  %v951 = vmax.bf16 %v949, %v950
  %v952 = vmax.bf16 %v951, 0
  %953 = vst [vmem:[#allocation3 + $0x48] sm:$0xff] %v952
  %v954 = vld [vmem:[#allocation2 + $0x140] sm:$0xff]
  %v955 = vld [vmem:[#allocation2 + $0x148] sm:$0xff]
  %v956 = vld [vmem:[#allocation2 + $0x150] sm:$0xff]
  %v957 = vld [vmem:[#allocation2 + $0x158] sm:$0xff]
  %v958 = vmax.bf16 %v954, %v956
  %v959 = vmax.bf16 %v955, %v957
  %v960 = vmax.bf16 %v958, %v959
  %v961 = vmax.bf16 %v960, 0
  %962 = vst [vmem:[#allocation3 + $0x50] sm:$0xff] %v961
  %v963 = vld [vmem:[#allocation2 + $0x160] sm:$0xff]
  %v964 = vld [vmem:[#allocation2 + $0x168] sm:$0xff]
  %v965 = vld [vmem:[#allocation2 + $0x170] sm:$0xff]
  %v966 = vld [vmem:[#allocation2 + $0x178] sm:$0xff]
  %v967 = vmax.bf16 %v963, %v965
  %v968 = vmax.bf16 %v964, %v966
  %v969 = vmax.bf16 %v967, %v968
  %v970 = vmax.bf16 %v969, 0
  %971 = vst [vmem:[#allocation3 + $0x58] sm:$0xff] %v970
  %v972 = vld [vmem:[#allocation3] sm:$0xff]
  %v973 = vld [vmem:[#allocation3 + $0x8] sm:$0xff]
  %v974 = vld [vmem:[#allocation3 + $0x10] sm:$0xff]
  %v975 = vld [vmem:[#allocation3 + $0x18] sm:$0xff]
  %v976 = vld [vmem:[#allocation3 + $0x20] sm:$0xff]
  %977 = vst [vmem:[#allocation4] sm:$0xff] %v972
  %978 = vst [vmem:[#allocation4 + $0x8] sm:$0xff] %v973
  %979 = vst [vmem:[#allocation4 + $0x10] sm:$0xff] %v974
  %980 = vst [vmem:[#allocation4 + $0x18] sm:$0xff] %v975
  %981 = vst [vmem:[#allocation4 + $0x20] sm:$0xff] %v976
  %v982 = vld [vmem:[#allocation3 + $0x8] sm:$0xff]
  %v983 = vld [vmem:[#allocation3 + $0x10] sm:$0xff]
  %v984 = vld [vmem:[#allocation3 + $0x18] sm:$0xff]
  %v985 = vld [vmem:[#allocation3 + $0x20] sm:$0xff]
  %v986 = vld [vmem:[#allocation3 + $0x28] sm:$0xff]
  %987 = vst [vmem:[#allocation4 + $0x28] sm:$0xff] %v982
  %988 = vst [vmem:[#allocation4 + $0x30] sm:$0xff] %v983
  %989 = vst [vmem:[#allocation4 + $0x38] sm:$0xff] %v984
  %990 = vst [vmem:[#allocation4 + $0x40] sm:$0xff] %v985
  %991 = vst [vmem:[#allocation4 + $0x48] sm:$0xff] %v986
  %v992 = vld [vmem:[#allocation3 + $0x10] sm:$0xff]
  %v993 = vld [vmem:[#allocation3 + $0x18] sm:$0xff]
  %v994 = vld [vmem:[#allocation3 + $0x20] sm:$0xff]
  %v995 = vld [vmem:[#allocation3 + $0x28] sm:$0xff]
  %v996 = vld [vmem:[#allocation3 + $0x30] sm:$0xff]
  %997 = vst [vmem:[#allocation4 + $0x50] sm:$0xff] %v992
  %998 = vst [vmem:[#allocation4 + $0x58] sm:$0xff] %v993
  %999 = vst [vmem:[#allocation4 + $0x60] sm:$0xff] %v994
  %1000 = vst [vmem:[#allocation4 + $0x68] sm:$0xff] %v995
  %1001 = vst [vmem:[#allocation4 + $0x70] sm:$0xff] %v996
  %v1002 = vld [vmem:[#allocation3 + $0x18] sm:$0xff]
  %v1003 = vld [vmem:[#allocation3 + $0x20] sm:$0xff]
  %v1004 = vld [vmem:[#allocation3 + $0x28] sm:$0xff]
  %v1005 = vld [vmem:[#allocation3 + $0x30] sm:$0xff]
  %v1006 = vld [vmem:[#allocation3 + $0x38] sm:$0xff]
  %1007 = vst [vmem:[#allocation4 + $0x78] sm:$0xff] %v1002
  %1008 = vst [vmem:[#allocation4 + $0x80] sm:$0xff] %v1003
  %1009 = vst [vmem:[#allocation4 + $0x88] sm:$0xff] %v1004
  %1010 = vst [vmem:[#allocation4 + $0x90] sm:$0xff] %v1005
  %1011 = vst [vmem:[#allocation4 + $0x98] sm:$0xff] %v1006
  %v1012 = vld [vmem:[#allocation3 + $0x20] sm:$0xff]
  %v1013 = vld [vmem:[#allocation3 + $0x28] sm:$0xff]
  %v1014 = vld [vmem:[#allocation3 + $0x30] sm:$0xff]
  %v1015 = vld [vmem:[#allocation3 + $0x38] sm:$0xff]
  %v1016 = vld [vmem:[#allocation3 + $0x40] sm:$0xff]
  %1017 = vst [vmem:[#allocation4 + $0xa0] sm:$0xff] %v1012
  %1018 = vst [vmem:[#allocation4 + $0xa8] sm:$0xff] %v1013
  %1019 = vst [vmem:[#allocation4 + $0xb0] sm:$0xff] %v1014
  %1020 = vst [vmem:[#allocation4 + $0xb8] sm:$0xff] %v1015
  %1021 = vst [vmem:[#allocation4 + $0xc0] sm:$0xff] %v1016
  %v1022 = vld [vmem:[#allocation3 + $0x28] sm:$0xff]
  %v1023 = vld [vmem:[#allocation3 + $0x30] sm:$0xff]
  %v1024 = vld [vmem:[#allocation3 + $0x38] sm:$0xff]
  %v1025 = vld [vmem:[#allocation3 + $0x40] sm:$0xff]
  %v1026 = vld [vmem:[#allocation3 + $0x48] sm:$0xff]
  %1027 = vst [vmem:[#allocation4 + $0xc8] sm:$0xff] %v1022
  %1028 = vst [vmem:[#allocation4 + $0xd0] sm:$0xff] %v1023
  %1029 = vst [vmem:[#allocation4 + $0xd8] sm:$0xff] %v1024
  %1030 = vst [vmem:[#allocation4 + $0xe0] sm:$0xff] %v1025
  %1031 = vst [vmem:[#allocation4 + $0xe8] sm:$0xff] %v1026
  %v1032 = vld [vmem:[#allocation3 + $0x30] sm:$0xff]
  %v1033 = vld [vmem:[#allocation3 + $0x38] sm:$0xff]
  %v1034 = vld [vmem:[#allocation3 + $0x40] sm:$0xff]
  %v1035 = vld [vmem:[#allocation3 + $0x48] sm:$0xff]
  %v1036 = vld [vmem:[#allocation3 + $0x50] sm:$0xff]
  %1037 = vst [vmem:[#allocation4 + $0xf0] sm:$0xff] %v1032
  %1038 = vst [vmem:[#allocation4 + $0xf8] sm:$0xff] %v1033
  %1039 = vst [vmem:[#allocation4 + $0x100] sm:$0xff] %v1034
  %1040 = vst [vmem:[#allocation4 + $0x108] sm:$0xff] %v1035
  %1041 = vst [vmem:[#allocation4 + $0x110] sm:$0xff] %v1036
  %v1042 = vld [vmem:[#allocation3 + $0x38] sm:$0xff]
  %v1043 = vld [vmem:[#allocation3 + $0x40] sm:$0xff]
  %v1044 = vld [vmem:[#allocation3 + $0x48] sm:$0xff]
  %v1045 = vld [vmem:[#allocation3 + $0x50] sm:$0xff]
  %v1046 = vld [vmem:[#allocation3 + $0x58] sm:$0xff]
  %1047 = vst [vmem:[#allocation4 + $0x118] sm:$0xff] %v1042
  %1048 = vst [vmem:[#allocation4 + $0x120] sm:$0xff] %v1043
  %1049 = vst [vmem:[#allocation4 + $0x128] sm:$0xff] %v1044
  %1050 = vst [vmem:[#allocation4 + $0x130] sm:$0xff] %v1045
  %1051 = vst [vmem:[#allocation4 + $0x138] sm:$0xff] %v1046
  %v1052 = vld [vmem:[#allocation4] sm:$0xff]
  %v1053 = vld [vmem:[#allocation4 + $0x8] sm:$0xff]
  %v1054 = vld [vmem:[#allocation4 + $0x10] sm:$0xff]
  %v1055 = vld [vmem:[#allocation4 + $0x18] sm:$0xff]
  %v1056 = vld [vmem:[#allocation4 + $0x20] sm:$0xff]
  %v1057 = vld [vmem:[#allocation4 + $0x28] sm:$0xff]
  %v1058 = vld [vmem:[#allocation4 + $0x30] sm:$0xff]
  %v1059 = vld [vmem:[#allocation4 + $0x38] sm:$0xff]
  %v1060 = vld [vmem:[#allocation4 + $0x40] sm:$0xff]
  %v1061 = vld [vmem:[#allocation4 + $0x48] sm:$0xff]
  %v1062 = vld [vmem:[#allocation4 + $0x50] sm:$0xff]
  %v1063 = vld [vmem:[#allocation4 + $0x58] sm:$0xff]
  %v1064 = vld [vmem:[#allocation4 + $0x60] sm:$0xff]
  %v1065 = vld [vmem:[#allocation4 + $0x68] sm:$0xff]
  %v1066 = vld [vmem:[#allocation4 + $0x70] sm:$0xff]
  %v1067 = vld [vmem:[#allocation4 + $0x78] sm:$0xff]
  %v1068 = vld [vmem:[#allocation4 + $0x80] sm:$0xff]
  %v1069 = vld [vmem:[#allocation4 + $0x88] sm:$0xff]
  %v1070 = vld [vmem:[#allocation4 + $0x90] sm:$0xff]
  %v1071 = vld [vmem:[#allocation4 + $0x98] sm:$0xff]
  %v1072 = vld [vmem:[#allocation4 + $0xa0] sm:$0xff]
  %v1073 = vld [vmem:[#allocation4 + $0xa8] sm:$0xff]
  %v1074 = vld [vmem:[#allocation4 + $0xb0] sm:$0xff]
  %v1075 = vld [vmem:[#allocation4 + $0xb8] sm:$0xff]
  %v1076 = vld [vmem:[#allocation4 + $0xc0] sm:$0xff]
  %v1077 = vld [vmem:[#allocation4 + $0xc8] sm:$0xff]
  %v1078 = vld [vmem:[#allocation4 + $0xd0] sm:$0xff]
  %v1079 = vld [vmem:[#allocation4 + $0xd8] sm:$0xff]
  %v1080 = vld [vmem:[#allocation4 + $0xe0] sm:$0xff]
  %v1081 = vld [vmem:[#allocation4 + $0xe8] sm:$0xff]
  %v1082 = vld [vmem:[#allocation4 + $0xf0] sm:$0xff]
  %v1083 = vld [vmem:[#allocation4 + $0xf8] sm:$0xff]
  %v1084 = vld [vmem:[#allocation4 + $0x100] sm:$0xff]
  %v1085 = vld [vmem:[#allocation4 + $0x108] sm:$0xff]
  %v1086 = vld [vmem:[#allocation4 + $0x110] sm:$0xff]
  %v1087 = vld [vmem:[#allocation4 + $0x118] sm:$0xff]
  %v1088 = vld [vmem:[#allocation4 + $0x120] sm:$0xff]
  %v1089 = vld [vmem:[#allocation4 + $0x128] sm:$0xff]
  %v1090 = vld [vmem:[#allocation4 + $0x130] sm:$0xff]
  %v1091 = vld [vmem:[#allocation4 + $0x138] sm:$0xff]
  %v1092 = vld [vmem:[%s3] sm:$0xff]
  %v1093 = vld [vmem:[%s3 + $0x8] sm:$0xff]
  %v1094 = vld [vmem:[%s3 + $0x10] sm:$0xff]
  %v1095 = vld [vmem:[%s3 + $0x18] sm:$0xff]
  %v1096 = vld [vmem:[%s3 + $0x20] sm:$0xff]
  %v1097 = vld [vmem:[%s3 + $0x28] sm:$0xff]
  %v1098 = vld [vmem:[%s3 + $0x30] sm:$0xff]
  %v1099 = vld [vmem:[%s3 + $0x38] sm:$0xff]
  %v1100 = vld [vmem:[%s3 + $0x40] sm:$0xff]
  %v1101 = vld [vmem:[%s3 + $0x48] sm:$0xff]
  %v1102 = vld [vmem:[%s3 + $0x50] sm:$0xff]
  %v1103 = vld [vmem:[%s3 + $0x58] sm:$0xff]
  %v1104 = vld [vmem:[%s3 + $0x60] sm:$0xff]
  %v1105 = vld [vmem:[%s3 + $0x68] sm:$0xff]
  %v1106 = vld [vmem:[%s3 + $0x70] sm:$0xff]
  %v1107 = vld [vmem:[%s3 + $0x78] sm:$0xff]
  %v1108 = vld [vmem:[%s3 + $0x80] sm:$0xff]
  %v1109 = vld [vmem:[%s3 + $0x88] sm:$0xff]
  %v1110 = vld [vmem:[%s3 + $0x90] sm:$0xff]
  %v1111 = vld [vmem:[%s3 + $0x98] sm:$0xff]
  %v1112 = vld [vmem:[%s3 + $0xa0] sm:$0xff]
  %v1113 = vld [vmem:[%s3 + $0xa8] sm:$0xff]
  %v1114 = vld [vmem:[%s3 + $0xb0] sm:$0xff]
  %v1115 = vld [vmem:[%s3 + $0xb8] sm:$0xff]
  %v1116 = vld [vmem:[%s3 + $0xc0] sm:$0xff]
  %v1117 = vld [vmem:[%s3 + $0xc8] sm:$0xff]
  %v1118 = vld [vmem:[%s3 + $0xd0] sm:$0xff]
  %v1119 = vld [vmem:[%s3 + $0xd8] sm:$0xff]
  %v1120 = vld [vmem:[%s3 + $0xe0] sm:$0xff]
  %v1121 = vld [vmem:[%s3 + $0xe8] sm:$0xff]
  %v1122 = vld [vmem:[%s3 + $0xf0] sm:$0xff]
  %v1123 = vld [vmem:[%s3 + $0xf8] sm:$0xff]
  %v1124 = vld [vmem:[%s3 + $0x100] sm:$0xff]
  %v1125 = vld [vmem:[%s3 + $0x108] sm:$0xff]
  %v1126 = vld [vmem:[%s3 + $0x110] sm:$0xff]
  %v1127 = vld [vmem:[%s3 + $0x118] sm:$0xff]
  %v1128 = vld [vmem:[%s3 + $0x120] sm:$0xff]
  %v1129 = vld [vmem:[%s3 + $0x128] sm:$0xff]
  %v1130 = vld [vmem:[%s3 + $0x130] sm:$0xff]
  %v1131 = vld [vmem:[%s3 + $0x138] sm:$0xff]
  %v1132 = vld [vmem:[%s3 + $0x140] sm:$0xff]
  %v1133 = vld [vmem:[%s3 + $0x148] sm:$0xff]
  %v1134 = vld [vmem:[%s3 + $0x150] sm:$0xff]
  %v1135 = vld [vmem:[%s3 + $0x158] sm:$0xff]
  %v1136 = vld [vmem:[%s3 + $0x160] sm:$0xff]
  %v1137 = vld [vmem:[%s3 + $0x168] sm:$0xff]
  %v1138 = vld [vmem:[%s3 + $0x170] sm:$0xff]
  %v1139 = vld [vmem:[%s3 + $0x178] sm:$0xff]
  %v1140 = vld [vmem:[%s3 + $0x180] sm:$0xff]
  %v1141 = vld [vmem:[%s3 + $0x188] sm:$0xff]
  %v1142 = vld [vmem:[%s3 + $0x190] sm:$0xff]
  %v1143 = vld [vmem:[%s3 + $0x198] sm:$0xff]
  %v1144 = vld [vmem:[%s3 + $0x1a0] sm:$0xff]
  %v1145 = vld [vmem:[%s3 + $0x1a8] sm:$0xff]
  %v1146 = vld [vmem:[%s3 + $0x1b0] sm:$0xff]
  %v1147 = vld [vmem:[%s3 + $0x1b8] sm:$0xff]
  %v1148 = vld [vmem:[%s3 + $0x1c0] sm:$0xff]
  %v1149 = vld [vmem:[%s3 + $0x1c8] sm:$0xff]
  %v1150 = vld [vmem:[%s3 + $0x1d0] sm:$0xff]
  %v1151 = vld [vmem:[%s3 + $0x1d8] sm:$0xff]
  %v1152 = vld [vmem:[%s3 + $0x1e0] sm:$0xff]
  %v1153 = vld [vmem:[%s3 + $0x1e8] sm:$0xff]
  %v1154 = vld [vmem:[%s3 + $0x1f0] sm:$0xff]
  %v1155 = vld [vmem:[%s3 + $0x1f8] sm:$0xff]
  %v1156 = vld [vmem:[%s3 + $0x200] sm:$0xff]
  %v1157 = vld [vmem:[%s3 + $0x208] sm:$0xff]
  %v1158 = vld [vmem:[%s3 + $0x210] sm:$0xff]
  %v1159 = vld [vmem:[%s3 + $0x218] sm:$0xff]
  %v1160 = vld [vmem:[%s3 + $0x220] sm:$0xff]
  %v1161 = vld [vmem:[%s3 + $0x228] sm:$0xff]
  %v1162 = vld [vmem:[%s3 + $0x230] sm:$0xff]
  %v1163 = vld [vmem:[%s3 + $0x238] sm:$0xff]
  %v1164 = vld [vmem:[%s3 + $0x240] sm:$0xff]
  %v1165 = vld [vmem:[%s3 + $0x248] sm:$0xff]
  %v1166 = vld [vmem:[%s3 + $0x250] sm:$0xff]
  %v1167 = vld [vmem:[%s3 + $0x258] sm:$0xff]
  %v1168 = vld [vmem:[%s3 + $0x260] sm:$0xff]
  %v1169 = vld [vmem:[%s3 + $0x268] sm:$0xff]
  %v1170 = vld [vmem:[%s3 + $0x270] sm:$0xff]
  %v1171 = vld [vmem:[%s3 + $0x278] sm:$0xff]
  %v1172 = vld [vmem:[%s4] sm:$0x3]
  %v1174 = vlaneseq
  %v1175 = vshrl.u32 %v1174, 7
  %v1176 = vsub.s32 0, %v1175
  %v1177 = vrot.slane %v1172, %v1176
  %v1178 = vlaneseq
  %v1179 = vshrl.u32 %v1178, 7
  %v1180 = vsub.s32 1, %v1179
  %v1181 = vrot.slane %v1172, %v1180
  %v1264 = vunpack.c.l.b16 %v1092
  %v1265 = vunpack.c.h.b16 %v1092
  %v1266 = vunpack.c.l.b16 %v1093
  %v1267 = vunpack.c.h.b16 %v1093
  %v1268 = vunpack.c.l.b16 %v1094
  %v1269 = vunpack.c.h.b16 %v1094
  %v1270 = vunpack.c.l.b16 %v1095
  %v1271 = vunpack.c.h.b16 %v1095
  %v1272 = vunpack.c.l.b16 %v1096
  %v1273 = vunpack.c.h.b16 %v1096
  %v1274 = vunpack.c.l.b16 %v1097
  %v1275 = vunpack.c.h.b16 %v1097
  %v1276 = vunpack.c.l.b16 %v1098
  %v1277 = vunpack.c.h.b16 %v1098
  %v1278 = vunpack.c.l.b16 %v1099
  %v1279 = vunpack.c.h.b16 %v1099
  %v1280 = vunpack.c.l.b16 %v1100
  %v1281 = vunpack.c.h.b16 %v1100
  %v1282 = vunpack.c.l.b16 %v1101
  %v1283 = vunpack.c.h.b16 %v1101
  %v1284 = vunpack.c.l.b16 %v1102
  %v1285 = vunpack.c.h.b16 %v1102
  %v1286 = vunpack.c.l.b16 %v1103
  %v1287 = vunpack.c.h.b16 %v1103
  %v1288 = vunpack.c.l.b16 %v1104
  %v1289 = vunpack.c.h.b16 %v1104
  %v1290 = vunpack.c.l.b16 %v1105
  %v1291 = vunpack.c.h.b16 %v1105
  %v1292 = vunpack.c.l.b16 %v1106
  %v1293 = vunpack.c.h.b16 %v1106
  %v1294 = vunpack.c.l.b16 %v1107
  %v1295 = vunpack.c.h.b16 %v1107
  %v1296 = vunpack.c.l.b16 %v1108
  %v1297 = vunpack.c.h.b16 %v1108
  %v1298 = vunpack.c.l.b16 %v1109
  %v1299 = vunpack.c.h.b16 %v1109
  %v1300 = vunpack.c.l.b16 %v1110
  %v1301 = vunpack.c.h.b16 %v1110
  %v1302 = vunpack.c.l.b16 %v1111
  %v1303 = vunpack.c.h.b16 %v1111
  %v1304 = vunpack.c.l.b16 %v1112
  %v1305 = vunpack.c.h.b16 %v1112
  %v1306 = vunpack.c.l.b16 %v1113
  %v1307 = vunpack.c.h.b16 %v1113
  %v1308 = vunpack.c.l.b16 %v1114
  %v1309 = vunpack.c.h.b16 %v1114
  %v1310 = vunpack.c.l.b16 %v1115
  %v1311 = vunpack.c.h.b16 %v1115
  %v1312 = vunpack.c.l.b16 %v1116
  %v1313 = vunpack.c.h.b16 %v1116
  %v1314 = vunpack.c.l.b16 %v1117
  %v1315 = vunpack.c.h.b16 %v1117
  %v1316 = vunpack.c.l.b16 %v1118
  %v1317 = vunpack.c.h.b16 %v1118
  %v1318 = vunpack.c.l.b16 %v1119
  %v1319 = vunpack.c.h.b16 %v1119
  %v1320 = vunpack.c.l.b16 %v1120
  %v1321 = vunpack.c.h.b16 %v1120
  %v1322 = vunpack.c.l.b16 %v1121
  %v1323 = vunpack.c.h.b16 %v1121
  %v1324 = vunpack.c.l.b16 %v1122
  %v1325 = vunpack.c.h.b16 %v1122
  %v1326 = vunpack.c.l.b16 %v1123
  %v1327 = vunpack.c.h.b16 %v1123
  %v1328 = vunpack.c.l.b16 %v1124
  %v1329 = vunpack.c.h.b16 %v1124
  %v1330 = vunpack.c.l.b16 %v1125
  %v1331 = vunpack.c.h.b16 %v1125
  %v1332 = vunpack.c.l.b16 %v1126
  %v1333 = vunpack.c.h.b16 %v1126
  %v1334 = vunpack.c.l.b16 %v1127
  %v1335 = vunpack.c.h.b16 %v1127
  %v1336 = vunpack.c.l.b16 %v1128
  %v1337 = vunpack.c.h.b16 %v1128
  %v1338 = vunpack.c.l.b16 %v1129
  %v1339 = vunpack.c.h.b16 %v1129
  %v1340 = vunpack.c.l.b16 %v1130
  %v1341 = vunpack.c.h.b16 %v1130
  %v1342 = vunpack.c.l.b16 %v1131
  %v1343 = vunpack.c.h.b16 %v1131
  %v1344 = vunpack.c.l.b16 %v1132
  %v1345 = vunpack.c.h.b16 %v1132
  %v1346 = vunpack.c.l.b16 %v1133
  %v1347 = vunpack.c.h.b16 %v1133
  %v1348 = vunpack.c.l.b16 %v1134
  %v1349 = vunpack.c.h.b16 %v1134
  %v1350 = vunpack.c.l.b16 %v1135
  %v1351 = vunpack.c.h.b16 %v1135
  %v1352 = vunpack.c.l.b16 %v1136
  %v1353 = vunpack.c.h.b16 %v1136
  %v1354 = vunpack.c.l.b16 %v1137
  %v1355 = vunpack.c.h.b16 %v1137
  %v1356 = vunpack.c.l.b16 %v1138
  %v1357 = vunpack.c.h.b16 %v1138
  %v1358 = vunpack.c.l.b16 %v1139
  %v1359 = vunpack.c.h.b16 %v1139
  %v1360 = vunpack.c.l.b16 %v1140
  %v1361 = vunpack.c.h.b16 %v1140
  %v1362 = vunpack.c.l.b16 %v1141
  %v1363 = vunpack.c.h.b16 %v1141
  %v1364 = vunpack.c.l.b16 %v1142
  %v1365 = vunpack.c.h.b16 %v1142
  %v1366 = vunpack.c.l.b16 %v1143
  %v1367 = vunpack.c.h.b16 %v1143
  %v1368 = vunpack.c.l.b16 %v1144
  %v1369 = vunpack.c.h.b16 %v1144
  %v1370 = vunpack.c.l.b16 %v1145
  %v1371 = vunpack.c.h.b16 %v1145
  %v1372 = vunpack.c.l.b16 %v1146
  %v1373 = vunpack.c.h.b16 %v1146
  %v1374 = vunpack.c.l.b16 %v1147
  %v1375 = vunpack.c.h.b16 %v1147
  %v1376 = vunpack.c.l.b16 %v1148
  %v1377 = vunpack.c.h.b16 %v1148
  %v1378 = vunpack.c.l.b16 %v1149
  %v1379 = vunpack.c.h.b16 %v1149
  %v1380 = vunpack.c.l.b16 %v1150
  %v1381 = vunpack.c.h.b16 %v1150
  %v1382 = vunpack.c.l.b16 %v1151
  %v1383 = vunpack.c.h.b16 %v1151
  %v1384 = vunpack.c.l.b16 %v1152
  %v1385 = vunpack.c.h.b16 %v1152
  %v1386 = vunpack.c.l.b16 %v1153
  %v1387 = vunpack.c.h.b16 %v1153
  %v1388 = vunpack.c.l.b16 %v1154
  %v1389 = vunpack.c.h.b16 %v1154
  %v1390 = vunpack.c.l.b16 %v1155
  %v1391 = vunpack.c.h.b16 %v1155
  %v1392 = vunpack.c.l.b16 %v1156
  %v1393 = vunpack.c.h.b16 %v1156
  %v1394 = vunpack.c.l.b16 %v1157
  %v1395 = vunpack.c.h.b16 %v1157
  %v1396 = vunpack.c.l.b16 %v1158
  %v1397 = vunpack.c.h.b16 %v1158
  %v1398 = vunpack.c.l.b16 %v1159
  %v1399 = vunpack.c.h.b16 %v1159
  %v1400 = vunpack.c.l.b16 %v1160
  %v1401 = vunpack.c.h.b16 %v1160
  %v1402 = vunpack.c.l.b16 %v1161
  %v1403 = vunpack.c.h.b16 %v1161
  %v1404 = vunpack.c.l.b16 %v1162
  %v1405 = vunpack.c.h.b16 %v1162
  %v1406 = vunpack.c.l.b16 %v1163
  %v1407 = vunpack.c.h.b16 %v1163
  %v1408 = vunpack.c.l.b16 %v1164
  %v1409 = vunpack.c.h.b16 %v1164
  %v1410 = vunpack.c.l.b16 %v1165
  %v1411 = vunpack.c.h.b16 %v1165
  %v1412 = vunpack.c.l.b16 %v1166
  %v1413 = vunpack.c.h.b16 %v1166
  %v1414 = vunpack.c.l.b16 %v1167
  %v1415 = vunpack.c.h.b16 %v1167
  %v1416 = vunpack.c.l.b16 %v1168
  %v1417 = vunpack.c.h.b16 %v1168
  %v1418 = vunpack.c.l.b16 %v1169
  %v1419 = vunpack.c.h.b16 %v1169
  %v1420 = vunpack.c.l.b16 %v1170
  %v1421 = vunpack.c.h.b16 %v1170
  %v1422 = vunpack.c.l.b16 %v1171
  %v1423 = vunpack.c.h.b16 %v1171
  %v1424 = vpack.c.b16 %v1266, %v1264
  %v1425 = vpack.c.b16 %v1267, %v1265
  %v1426 = vpack.c.b16 %v1270, %v1268
  %v1427 = vpack.c.b16 %v1271, %v1269
  %v1428 = vpack.c.b16 %v1274, %v1272
  %v1429 = vpack.c.b16 %v1275, %v1273
  %v1430 = vpack.c.b16 %v1278, %v1276
  %v1431 = vpack.c.b16 %v1279, %v1277
  %v1432 = vpack.c.b16 %v1282, %v1280
  %v1433 = vpack.c.b16 %v1283, %v1281
  %v1434 = vpack.c.b16 %v1286, %v1284
  %v1435 = vpack.c.b16 %v1287, %v1285
  %v1436 = vpack.c.b16 %v1290, %v1288
  %v1437 = vpack.c.b16 %v1291, %v1289
  %v1438 = vpack.c.b16 %v1294, %v1292
  %v1439 = vpack.c.b16 %v1295, %v1293
  %v1440 = vpack.c.b16 %v1298, %v1296
  %v1441 = vpack.c.b16 %v1299, %v1297
  %v1442 = vpack.c.b16 %v1302, %v1300
  %v1443 = vpack.c.b16 %v1303, %v1301
  %v1444 = vpack.c.b16 %v1306, %v1304
  %v1445 = vpack.c.b16 %v1307, %v1305
  %v1446 = vpack.c.b16 %v1310, %v1308
  %v1447 = vpack.c.b16 %v1311, %v1309
  %v1448 = vpack.c.b16 %v1314, %v1312
  %v1449 = vpack.c.b16 %v1315, %v1313
  %v1450 = vpack.c.b16 %v1318, %v1316
  %v1451 = vpack.c.b16 %v1319, %v1317
  %v1452 = vpack.c.b16 %v1322, %v1320
  %v1453 = vpack.c.b16 %v1323, %v1321
  %v1454 = vpack.c.b16 %v1326, %v1324
  %v1455 = vpack.c.b16 %v1327, %v1325
  %v1456 = vpack.c.b16 %v1330, %v1328
  %v1457 = vpack.c.b16 %v1331, %v1329
  %v1458 = vpack.c.b16 %v1334, %v1332
  %v1459 = vpack.c.b16 %v1335, %v1333
  %v1460 = vpack.c.b16 %v1338, %v1336
  %v1461 = vpack.c.b16 %v1339, %v1337
  %v1462 = vpack.c.b16 %v1342, %v1340
  %v1463 = vpack.c.b16 %v1343, %v1341
  %v1464 = vpack.c.b16 %v1346, %v1344
  %v1465 = vpack.c.b16 %v1347, %v1345
  %v1466 = vpack.c.b16 %v1350, %v1348
  %v1467 = vpack.c.b16 %v1351, %v1349
  %v1468 = vpack.c.b16 %v1354, %v1352
  %v1469 = vpack.c.b16 %v1355, %v1353
  %v1470 = vpack.c.b16 %v1358, %v1356
  %v1471 = vpack.c.b16 %v1359, %v1357
  %v1472 = vpack.c.b16 %v1362, %v1360
  %v1473 = vpack.c.b16 %v1363, %v1361
  %v1474 = vpack.c.b16 %v1366, %v1364
  %v1475 = vpack.c.b16 %v1367, %v1365
  %v1476 = vpack.c.b16 %v1370, %v1368
  %v1477 = vpack.c.b16 %v1371, %v1369
  %v1478 = vpack.c.b16 %v1374, %v1372
  %v1479 = vpack.c.b16 %v1375, %v1373
  %v1480 = vpack.c.b16 %v1378, %v1376
  %v1481 = vpack.c.b16 %v1379, %v1377
  %v1482 = vpack.c.b16 %v1382, %v1380
  %v1483 = vpack.c.b16 %v1383, %v1381
  %v1484 = vpack.c.b16 %v1386, %v1384
  %v1485 = vpack.c.b16 %v1387, %v1385
  %v1486 = vpack.c.b16 %v1390, %v1388
  %v1487 = vpack.c.b16 %v1391, %v1389
  %v1488 = vpack.c.b16 %v1394, %v1392
  %v1489 = vpack.c.b16 %v1395, %v1393
  %v1490 = vpack.c.b16 %v1398, %v1396
  %v1491 = vpack.c.b16 %v1399, %v1397
  %v1492 = vpack.c.b16 %v1402, %v1400
  %v1493 = vpack.c.b16 %v1403, %v1401
  %v1494 = vpack.c.b16 %v1406, %v1404
  %v1495 = vpack.c.b16 %v1407, %v1405
  %v1496 = vpack.c.b16 %v1410, %v1408
  %v1497 = vpack.c.b16 %v1411, %v1409
  %v1498 = vpack.c.b16 %v1414, %v1412
  %v1499 = vpack.c.b16 %v1415, %v1413
  %v1500 = vpack.c.b16 %v1418, %v1416
  %v1501 = vpack.c.b16 %v1419, %v1417
  %v1502 = vpack.c.b16 %v1422, %v1420
  %v1503 = vpack.c.b16 %v1423, %v1421
  %1584 = vmatprep.subr.bf16.mxu0 %v1425
  %1585 = vmatpush1.bf16.msra.mxu0 %v1424
  %1586 = vmatprep.subr.bf16.mxu0 %v1427
  %1587 = vmatpush1.bf16.msra.mxu0 %v1426
  %1588 = vmatprep.subr.bf16.mxu0 %v1429
  %1589 = vmatpush1.bf16.msra.mxu0 %v1428
  %1590 = vmatprep.subr.bf16.mxu0 %v1431
  %1591 = vmatpush1.bf16.msra.mxu0 %v1430
  %1592 = vmatprep.subr.bf16.mxu0 %v1433
  %1593 = vmatpush1.bf16.msra.mxu0 %v1432
  %1594 = vmatprep.subr.bf16.mxu0 %v1435
  %1595 = vmatpush1.bf16.msra.mxu0 %v1434
  %1596 = vmatprep.subr.bf16.mxu0 %v1437
  %1597 = vmatpush1.bf16.msra.mxu0 %v1436
  %1598 = vmatprep.subr.bf16.mxu0 %v1439
  %1599 = vmatpush1.bf16.msra.mxu0 %v1438
  %1600 = vmatprep.subr.bf16.mxu0 %v1441
  %1601 = vmatpush1.bf16.msra.mxu0 %v1440
  %1602 = vmatprep.subr.bf16.mxu0 %v1443
  %1603 = vmatpush1.bf16.msra.mxu0 %v1442
  %1604 = vmatprep.subr.bf16.mxu0 %v1445
  %1605 = vmatpush1.bf16.msra.mxu0 %v1444
  %1606 = vmatprep.subr.bf16.mxu0 %v1447
  %1607 = vmatpush1.bf16.msra.mxu0 %v1446
  %1608 = vmatprep.subr.bf16.mxu0 %v1449
  %1609 = vmatpush1.bf16.msra.mxu0 %v1448
  %1610 = vmatprep.subr.bf16.mxu0 %v1451
  %1611 = vmatpush1.bf16.msra.mxu0 %v1450
  %1612 = vmatprep.subr.bf16.mxu0 %v1453
  %1613 = vmatpush1.bf16.msra.mxu0 %v1452
  %1614 = vmatprep.subr.bf16.mxu0 %v1455
  %1615 = vmatpush1.bf16.msra.mxu0 %v1454
  %1616 = vmatprep.mubr.bf16.mxu0 %v1053
  %1617 = vmatmul.mubr.bf16.gmra.mrb[0].mxu0 %v1052
  %v1618 = vpop.f32.mrb[0].mxu0
  %v1619 = vadd.f32 %v1177, %v1618
  %v1620 = vpop.f32.mrb[0].mxu0
  %v1621 = vadd.f32 %v1181, %v1620
  %v1622 = vpop.f32.mrb[0].mxu0
  %v1623 = vadd.f32 %v1177, %v1622
  %v1624 = vpop.f32.mrb[0].mxu0
  %v1625 = vadd.f32 %v1181, %v1624
  %1626 = vmatprep.mubr.bf16.mxu0 %v1058
  %1627 = vmatmul.mubr.bf16.gmra.mrb[0].mxu0 %v1057
  %v1628 = vpop.f32.mrb[0].mxu0
  %v1629 = vadd.f32 %v1177, %v1628
  %v1630 = vpop.f32.mrb[0].mxu0
  %v1631 = vadd.f32 %v1181, %v1630
  %v1632 = vpop.f32.mrb[0].mxu0
  %v1633 = vadd.f32 %v1177, %v1632
  %v1634 = vpop.f32.mrb[0].mxu0
  %v1635 = vadd.f32 %v1181, %v1634
  %1636 = vmatprep.mubr.bf16.mxu0 %v1063
  %1637 = vmatmul.mubr.bf16.gmra.mrb[0].mxu0 %v1062
  %v1638 = vpop.f32.mrb[0].mxu0
  %v1639 = vadd.f32 %v1177, %v1638
  %v1640 = vpop.f32.mrb[0].mxu0
  %v1641 = vadd.f32 %v1181, %v1640
  %v1642 = vpop.f32.mrb[0].mxu0
  %v1643 = vadd.f32 %v1177, %v1642
  %v1644 = vpop.f32.mrb[0].mxu0
  %v1645 = vadd.f32 %v1181, %v1644
  %1646 = vmatprep.mubr.bf16.mxu0 %v1068
  %1647 = vmatmul.mubr.bf16.gmra.mrb[0].mxu0 %v1067
  %v1648 = vpop.f32.mrb[0].mxu0
  %v1649 = vadd.f32 %v1177, %v1648
  %v1650 = vpop.f32.mrb[0].mxu0
  %v1651 = vadd.f32 %v1181, %v1650
  %v1652 = vpop.f32.mrb[0].mxu0
  %v1653 = vadd.f32 %v1177, %v1652
  %v1654 = vpop.f32.mrb[0].mxu0
  %v1655 = vadd.f32 %v1181, %v1654
  %1656 = vmatprep.mubr.bf16.mxu0 %v1073
  %1657 = vmatmul.mubr.bf16.gmra.mrb[0].mxu0 %v1072
  %v1658 = vpop.f32.mrb[0].mxu0
  %v1659 = vadd.f32 %v1177, %v1658
  %v1660 = vpop.f32.mrb[0].mxu0
  %v1661 = vadd.f32 %v1181, %v1660
  %v1662 = vpop.f32.mrb[0].mxu0
  %v1663 = vadd.f32 %v1177, %v1662
  %v1664 = vpop.f32.mrb[0].mxu0
  %v1665 = vadd.f32 %v1181, %v1664
  %1666 = vmatprep.mubr.bf16.mxu0 %v1078
  %1667 = vmatmul.mubr.bf16.gmra.mrb[0].mxu0 %v1077
  %v1668 = vpop.f32.mrb[0].mxu0
  %v1669 = vadd.f32 %v1177, %v1668
  %v1670 = vpop.f32.mrb[0].mxu0
  %v1671 = vadd.f32 %v1181, %v1670
  %v1672 = vpop.f32.mrb[0].mxu0
  %v1673 = vadd.f32 %v1177, %v1672
  %v1674 = vpop.f32.mrb[0].mxu0
  %v1675 = vadd.f32 %v1181, %v1674
  %1676 = vmatprep.mubr.bf16.mxu0 %v1083
  %1677 = vmatmul.mubr.bf16.gmra.mrb[0].mxu0 %v1082
  %v1678 = vpop.f32.mrb[0].mxu0
  %v1679 = vadd.f32 %v1177, %v1678
  %v1680 = vpop.f32.mrb[0].mxu0
  %v1681 = vadd.f32 %v1181, %v1680
  %v1682 = vpop.f32.mrb[0].mxu0
  %v1683 = vadd.f32 %v1177, %v1682
  %v1684 = vpop.f32.mrb[0].mxu0
  %v1685 = vadd.f32 %v1181, %v1684
  %1686 = vmatprep.mubr.bf16.mxu0 %v1088
  %1687 = vmatmul.mubr.bf16.gmra.mrb[0].mxu0 %v1087
  %v1688 = vpop.f32.mrb[0].mxu0
  %v1689 = vadd.f32 %v1177, %v1688
  %v1690 = vpop.f32.mrb[0].mxu0
  %v1691 = vadd.f32 %v1181, %v1690
  %v1692 = vpop.f32.mrb[0].mxu0
  %v1693 = vadd.f32 %v1177, %v1692
  %v1694 = vpop.f32.mrb[0].mxu0
  %v1695 = vadd.f32 %v1181, %v1694
  %1696 = vdwg.mxu0
  %1697 = vmatprep.subr.bf16.mxu0 %v1457
  %1698 = vmatpush1.bf16.msra.mxu0 %v1456
  %1699 = vmatprep.subr.bf16.mxu0 %v1459
  %1700 = vmatpush1.bf16.msra.mxu0 %v1458
  %1701 = vmatprep.subr.bf16.mxu0 %v1461
  %1702 = vmatpush1.bf16.msra.mxu0 %v1460
  %1703 = vmatprep.subr.bf16.mxu0 %v1463
  %1704 = vmatpush1.bf16.msra.mxu0 %v1462
  %1705 = vmatprep.subr.bf16.mxu0 %v1465
  %1706 = vmatpush1.bf16.msra.mxu0 %v1464
  %1707 = vmatprep.subr.bf16.mxu0 %v1467
  %1708 = vmatpush1.bf16.msra.mxu0 %v1466
  %1709 = vmatprep.subr.bf16.mxu0 %v1469
  %1710 = vmatpush1.bf16.msra.mxu0 %v1468
  %1711 = vmatprep.subr.bf16.mxu0 %v1471
  %1712 = vmatpush1.bf16.msra.mxu0 %v1470
  %1713 = vmatprep.subr.bf16.mxu0 %v1473
  %1714 = vmatpush1.bf16.msra.mxu0 %v1472
  %1715 = vmatprep.subr.bf16.mxu0 %v1475
  %1716 = vmatpush1.bf16.msra.mxu0 %v1474
  %1717 = vmatprep.subr.bf16.mxu0 %v1477
  %1718 = vmatpush1.bf16.msra.mxu0 %v1476
  %1719 = vmatprep.subr.bf16.mxu0 %v1479
  %1720 = vmatpush1.bf16.msra.mxu0 %v1478
  %1721 = vmatprep.subr.bf16.mxu0 %v1481
  %1722 = vmatpush1.bf16.msra.mxu0 %v1480
  %1723 = vmatprep.subr.bf16.mxu0 %v1483
  %1724 = vmatpush1.bf16.msra.mxu0 %v1482
  %1725 = vmatprep.subr.bf16.mxu0 %v1485
  %1726 = vmatpush1.bf16.msra.mxu0 %v1484
  %1727 = vmatprep.subr.bf16.mxu0 %v1487
  %1728 = vmatpush1.bf16.msra.mxu0 %v1486
  %1729 = vmatprep.mubr.bf16.mxu0 %v1055
  %1730 = vmatmul.mubr.bf16.gmra.mrb[0].mxu0 %v1054
  %v1731 = vpop.f32.mrb[0].mxu0
  %v1732 = vadd.f32 %v1619, %v1731
  %v1733 = vpop.f32.mrb[0].mxu0
  %v1734 = vadd.f32 %v1621, %v1733
  %v1735 = vpop.f32.mrb[0].mxu0
  %v1736 = vadd.f32 %v1623, %v1735
  %v1737 = vpop.f32.mrb[0].mxu0
  %v1738 = vadd.f32 %v1625, %v1737
  %1739 = vmatprep.mubr.bf16.mxu0 %v1060
  %1740 = vmatmul.mubr.bf16.gmra.mrb[0].mxu0 %v1059
  %v1741 = vpop.f32.mrb[0].mxu0
  %v1742 = vadd.f32 %v1629, %v1741
  %v1743 = vpop.f32.mrb[0].mxu0
  %v1744 = vadd.f32 %v1631, %v1743
  %v1745 = vpop.f32.mrb[0].mxu0
  %v1746 = vadd.f32 %v1633, %v1745
  %v1747 = vpop.f32.mrb[0].mxu0
  %v1748 = vadd.f32 %v1635, %v1747
  %1749 = vmatprep.mubr.bf16.mxu0 %v1065
  %1750 = vmatmul.mubr.bf16.gmra.mrb[0].mxu0 %v1064
  %v1751 = vpop.f32.mrb[0].mxu0
  %v1752 = vadd.f32 %v1639, %v1751
  %v1753 = vpop.f32.mrb[0].mxu0
  %v1754 = vadd.f32 %v1641, %v1753
  %v1755 = vpop.f32.mrb[0].mxu0
  %v1756 = vadd.f32 %v1643, %v1755
  %v1757 = vpop.f32.mrb[0].mxu0
  %v1758 = vadd.f32 %v1645, %v1757
  %1759 = vmatprep.mubr.bf16.mxu0 %v1070
  %1760 = vmatmul.mubr.bf16.gmra.mrb[0].mxu0 %v1069
  %v1761 = vpop.f32.mrb[0].mxu0
  %v1762 = vadd.f32 %v1649, %v1761
  %v1763 = vpop.f32.mrb[0].mxu0
  %v1764 = vadd.f32 %v1651, %v1763
  %v1765 = vpop.f32.mrb[0].mxu0
  %v1766 = vadd.f32 %v1653, %v1765
  %v1767 = vpop.f32.mrb[0].mxu0
  %v1768 = vadd.f32 %v1655, %v1767
  %1769 = vmatprep.mubr.bf16.mxu0 %v1075
  %1770 = vmatmul.mubr.bf16.gmra.mrb[0].mxu0 %v1074
  %v1771 = vpop.f32.mrb[0].mxu0
  %v1772 = vadd.f32 %v1659, %v1771
  %v1773 = vpop.f32.mrb[0].mxu0
  %v1774 = vadd.f32 %v1661, %v1773
  %v1775 = vpop.f32.mrb[0].mxu0
  %v1776 = vadd.f32 %v1663, %v1775
  %v1777 = vpop.f32.mrb[0].mxu0
  %v1778 = vadd.f32 %v1665, %v1777
  %1779 = vmatprep.mubr.bf16.mxu0 %v1080
  %1780 = vmatmul.mubr.bf16.gmra.mrb[0].mxu0 %v1079
  %v1781 = vpop.f32.mrb[0].mxu0
  %v1782 = vadd.f32 %v1669, %v1781
  %v1783 = vpop.f32.mrb[0].mxu0
  %v1784 = vadd.f32 %v1671, %v1783
  %v1785 = vpop.f32.mrb[0].mxu0
  %v1786 = vadd.f32 %v1673, %v1785
  %v1787 = vpop.f32.mrb[0].mxu0
  %v1788 = vadd.f32 %v1675, %v1787
  %1789 = vmatprep.mubr.bf16.mxu0 %v1085
  %1790 = vmatmul.mubr.bf16.gmra.mrb[0].mxu0 %v1084
  %v1791 = vpop.f32.mrb[0].mxu0
  %v1792 = vadd.f32 %v1679, %v1791
  %v1793 = vpop.f32.mrb[0].mxu0
  %v1794 = vadd.f32 %v1681, %v1793
  %v1795 = vpop.f32.mrb[0].mxu0
  %v1796 = vadd.f32 %v1683, %v1795
  %v1797 = vpop.f32.mrb[0].mxu0
  %v1798 = vadd.f32 %v1685, %v1797
  %1799 = vmatprep.mubr.bf16.mxu0 %v1090
  %1800 = vmatmul.mubr.bf16.gmra.mrb[0].mxu0 %v1089
  %v1801 = vpop.f32.mrb[0].mxu0
  %v1802 = vadd.f32 %v1689, %v1801
  %v1803 = vpop.f32.mrb[0].mxu0
  %v1804 = vadd.f32 %v1691, %v1803
  %v1805 = vpop.f32.mrb[0].mxu0
  %v1806 = vadd.f32 %v1693, %v1805
  %v1807 = vpop.f32.mrb[0].mxu0
  %v1808 = vadd.f32 %v1695, %v1807
  %1809 = vdwg.mxu0
  %1810 = vmatprep.subr.bf16.mxu0 %v1489
  %1811 = vmatpush1.bf16.msra.mxu0 %v1488
  %1812 = vmatprep.subr.bf16.mxu0 %v1491
  %1813 = vmatpush1.bf16.msra.mxu0 %v1490
  %1814 = vmatprep.subr.bf16.mxu0 %v1493
  %1815 = vmatpush1.bf16.msra.mxu0 %v1492
  %1816 = vmatprep.subr.bf16.mxu0 %v1495
  %1817 = vmatpush1.bf16.msra.mxu0 %v1494
  %1818 = vmatprep.subr.bf16.mxu0 %v1497
  %1819 = vmatpush1.bf16.msra.mxu0 %v1496
  %1820 = vmatprep.subr.bf16.mxu0 %v1499
  %1821 = vmatpush1.bf16.msra.mxu0 %v1498
  %1822 = vmatprep.subr.bf16.mxu0 %v1501
  %1823 = vmatpush1.bf16.msra.mxu0 %v1500
  %1824 = vmatprep.subr.bf16.mxu0 %v1503
  %1825 = vmatpush1.bf16.msra.mxu0 %v1502
  %1826 = vmatprep.subr.bf16.mxu0 0
  %1827 = vmatpush1.bf16.msra.mxu0 0
  %1828 = vmatprep.subr.bf16.mxu0 0
  %1829 = vmatpush1.bf16.msra.mxu0 0
  %1830 = vmatprep.subr.bf16.mxu0 0
  %1831 = vmatpush1.bf16.msra.mxu0 0
  %1832 = vmatprep.subr.bf16.mxu0 0
  %1833 = vmatpush1.bf16.msra.mxu0 0
  %1834 = vmatprep.subr.bf16.mxu0 0
  %1835 = vmatpush1.bf16.msra.mxu0 0
  %1836 = vmatprep.subr.bf16.mxu0 0
  %1837 = vmatpush1.bf16.msra.mxu0 0
  %1838 = vmatprep.subr.bf16.mxu0 0
  %1839 = vmatpush1.bf16.msra.mxu0 0
  %1840 = vmatprep.subr.bf16.mxu0 0
  %1841 = vmatpush1.bf16.msra.mxu0 0
  %1842 = vmatprep.mubr.bf16.mxu0 0
  %1843 = vmatmul.mubr.bf16.gmra.mrb[0].mxu0 %v1056
  %v1844 = vpop.f32.mrb[0].mxu0
  %v1845 = vadd.f32 %v1732, %v1844
  %v1846 = vpop.f32.mrb[0].mxu0
  %v1847 = vadd.f32 %v1734, %v1846
  %v1848 = vpop.f32.mrb[0].mxu0
  %v1849 = vadd.f32 %v1736, %v1848
  %v1850 = vpop.f32.mrb[0].mxu0
  %v1851 = vadd.f32 %v1738, %v1850
  %1852 = vmatprep.mubr.bf16.mxu0 0
  %1853 = vmatmul.mubr.bf16.gmra.mrb[0].mxu0 %v1061
  %v1854 = vpop.f32.mrb[0].mxu0
  %v1855 = vadd.f32 %v1742, %v1854
  %v1856 = vpop.f32.mrb[0].mxu0
  %v1857 = vadd.f32 %v1744, %v1856
  %v1858 = vpop.f32.mrb[0].mxu0
  %v1859 = vadd.f32 %v1746, %v1858
  %v1860 = vpop.f32.mrb[0].mxu0
  %v1861 = vadd.f32 %v1748, %v1860
  %1862 = vmatprep.mubr.bf16.mxu0 0
  %1863 = vmatmul.mubr.bf16.gmra.mrb[0].mxu0 %v1066
  %v1864 = vpop.f32.mrb[0].mxu0
  %v1865 = vadd.f32 %v1752, %v1864
  %v1866 = vpop.f32.mrb[0].mxu0
  %v1867 = vadd.f32 %v1754, %v1866
  %v1868 = vpop.f32.mrb[0].mxu0
  %v1869 = vadd.f32 %v1756, %v1868
  %v1870 = vpop.f32.mrb[0].mxu0
  %v1871 = vadd.f32 %v1758, %v1870
  %1872 = vmatprep.mubr.bf16.mxu0 0
  %1873 = vmatmul.mubr.bf16.gmra.mrb[0].mxu0 %v1071
  %v1874 = vpop.f32.mrb[0].mxu0
  %v1875 = vadd.f32 %v1762, %v1874
  %v1876 = vpop.f32.mrb[0].mxu0
  %v1877 = vadd.f32 %v1764, %v1876
  %v1878 = vpop.f32.mrb[0].mxu0
  %v1879 = vadd.f32 %v1766, %v1878
  %v1880 = vpop.f32.mrb[0].mxu0
  %v1881 = vadd.f32 %v1768, %v1880
  %1882 = vmatprep.mubr.bf16.mxu0 0
  %1883 = vmatmul.mubr.bf16.gmra.mrb[0].mxu0 %v1076
  %v1884 = vpop.f32.mrb[0].mxu0
  %v1885 = vadd.f32 %v1772, %v1884
  %v1886 = vpop.f32.mrb[0].mxu0
  %v1887 = vadd.f32 %v1774, %v1886
  %v1888 = vpop.f32.mrb[0].mxu0
  %v1889 = vadd.f32 %v1776, %v1888
  %v1890 = vpop.f32.mrb[0].mxu0
  %v1891 = vadd.f32 %v1778, %v1890
  %1892 = vmatprep.mubr.bf16.mxu0 0
  %1893 = vmatmul.mubr.bf16.gmra.mrb[0].mxu0 %v1081
  %v1894 = vpop.f32.mrb[0].mxu0
  %v1895 = vadd.f32 %v1782, %v1894
  %v1896 = vpop.f32.mrb[0].mxu0
  %v1897 = vadd.f32 %v1784, %v1896
  %v1898 = vpop.f32.mrb[0].mxu0
  %v1899 = vadd.f32 %v1786, %v1898
  %v1900 = vpop.f32.mrb[0].mxu0
  %v1901 = vadd.f32 %v1788, %v1900
  %1902 = vmatprep.mubr.bf16.mxu0 0
  %1903 = vmatmul.mubr.bf16.gmra.mrb[0].mxu0 %v1086
  %v1904 = vpop.f32.mrb[0].mxu0
  %v1905 = vadd.f32 %v1792, %v1904
  %v1906 = vpop.f32.mrb[0].mxu0
  %v1907 = vadd.f32 %v1794, %v1906
  %v1908 = vpop.f32.mrb[0].mxu0
  %v1909 = vadd.f32 %v1796, %v1908
  %v1910 = vpop.f32.mrb[0].mxu0
  %v1911 = vadd.f32 %v1798, %v1910
  %1912 = vmatprep.mubr.bf16.mxu0 0
  %1913 = vmatmul.mubr.bf16.gmra.mrb[0].mxu0 %v1091
  %v1914 = vpop.f32.mrb[0].mxu0
  %v1915 = vadd.f32 %v1802, %v1914
  %v1916 = vpop.f32.mrb[0].mxu0
  %v1917 = vadd.f32 %v1804, %v1916
  %v1918 = vpop.f32.mrb[0].mxu0
  %v1919 = vadd.f32 %v1806, %v1918
  %v1920 = vpop.f32.mrb[0].mxu0
  %v1921 = vadd.f32 %v1808, %v1920
  %1922 = vdwg.mxu0
  %v1923 = vpack.c.bf16 %v1849, %v1845
  %v1924 = vpack.c.bf16 %v1851, %v1847
  %v1925 = vpack.c.bf16 %v1859, %v1855
  %v1926 = vpack.c.bf16 %v1861, %v1857
  %v1927 = vpack.c.bf16 %v1869, %v1865
  %v1928 = vpack.c.bf16 %v1871, %v1867
  %v1929 = vpack.c.bf16 %v1879, %v1875
  %v1930 = vpack.c.bf16 %v1881, %v1877
  %v1931 = vpack.c.bf16 %v1889, %v1885
  %v1932 = vpack.c.bf16 %v1891, %v1887
  %v1933 = vpack.c.bf16 %v1899, %v1895
  %v1934 = vpack.c.bf16 %v1901, %v1897
  %v1935 = vpack.c.bf16 %v1909, %v1905
  %v1936 = vpack.c.bf16 %v1911, %v1907
  %v1937 = vpack.c.bf16 %v1919, %v1915
  %v1938 = vpack.c.bf16 %v1921, %v1917
  %1939 = vst [vmem:[#allocation5] sm:$0xff] %v1923
  %1940 = vst [vmem:[#allocation5 + $0x8] sm:$0xff] %v1924
  %1941 = vst [vmem:[#allocation5 + $0x10] sm:$0xff] %v1925
  %1942 = vst [vmem:[#allocation5 + $0x18] sm:$0xff] %v1926
  %1943 = vst [vmem:[#allocation5 + $0x20] sm:$0xff] %v1927
  %1944 = vst [vmem:[#allocation5 + $0x28] sm:$0xff] %v1928
  %1945 = vst [vmem:[#allocation5 + $0x30] sm:$0xff] %v1929
  %1946 = vst [vmem:[#allocation5 + $0x38] sm:$0xff] %v1930
  %1947 = vst [vmem:[#allocation5 + $0x40] sm:$0xff] %v1931
  %1948 = vst [vmem:[#allocation5 + $0x48] sm:$0xff] %v1932
  %1949 = vst [vmem:[#allocation5 + $0x50] sm:$0xff] %v1933
  %1950 = vst [vmem:[#allocation5 + $0x58] sm:$0xff] %v1934
  %1951 = vst [vmem:[#allocation5 + $0x60] sm:$0xff] %v1935
  %1952 = vst [vmem:[#allocation5 + $0x68] sm:$0xff] %v1936
  %1953 = vst [vmem:[#allocation5 + $0x70] sm:$0xff] %v1937
  %1954 = vst [vmem:[#allocation5 + $0x78] sm:$0xff] %v1938
  %v1955 = vld [vmem:[#allocation5] sm:$0xff]
  %v1956 = vld [vmem:[#allocation5 + $0x8] sm:$0xff]
  %v1957 = vld [vmem:[#allocation5 + $0x10] sm:$0xff]
  %v1958 = vld [vmem:[#allocation5 + $0x18] sm:$0xff]
  %v1959 = vmax.bf16 %v1955, %v1957
  %v1960 = vmax.bf16 %v1956, %v1958
  %v1961 = vmax.bf16 %v1959, %v1960
  %v1962 = vmax.bf16 %v1961, 0
  %v1963 = vld [vmem:[#allocation5 + $0x20] sm:$0xff]
  %v1964 = vld [vmem:[#allocation5 + $0x28] sm:$0xff]
  %v1965 = vld [vmem:[#allocation5 + $0x30] sm:$0xff]
  %v1966 = vld [vmem:[#allocation5 + $0x38] sm:$0xff]
  %v1967 = vmax.bf16 %v1963, %v1965
  %v1968 = vmax.bf16 %v1964, %v1966
  %v1969 = vmax.bf16 %v1967, %v1968
  %v1970 = vmax.bf16 %v1969, 0
  %v1971 = vld [vmem:[#allocation5 + $0x40] sm:$0xff]
  %v1972 = vld [vmem:[#allocation5 + $0x48] sm:$0xff]
  %v1973 = vld [vmem:[#allocation5 + $0x50] sm:$0xff]
  %v1974 = vld [vmem:[#allocation5 + $0x58] sm:$0xff]
  %v1975 = vmax.bf16 %v1971, %v1973
  %v1976 = vmax.bf16 %v1972, %v1974
  %v1977 = vmax.bf16 %v1975, %v1976
  %v1978 = vmax.bf16 %v1977, 0
  %v1979 = vld [vmem:[#allocation5 + $0x60] sm:$0xff]
  %v1980 = vld [vmem:[#allocation5 + $0x68] sm:$0xff]
  %v1981 = vld [vmem:[#allocation5 + $0x70] sm:$0xff]
  %v1982 = vld [vmem:[#allocation5 + $0x78] sm:$0xff]
  %v1983 = vmax.bf16 %v1979, %v1981
  %v1984 = vmax.bf16 %v1980, %v1982
  %v1985 = vmax.bf16 %v1983, %v1984
  %v1986 = vmax.bf16 %v1985, 0
  %v1987 = vld [vmem:[%s5] sm:$0xf]
  %v1988 = vld [vmem:[%s5 + $0x4] sm:$0xf]
  %v1989 = vld [vmem:[%s5 + $0x8] sm:$0xf]
  %v1990 = vld [vmem:[%s5 + $0xc] sm:$0xf]
  %v1991 = vld [vmem:[%s5 + $0x10] sm:$0xf]
  %v1992 = vld [vmem:[%s5 + $0x14] sm:$0xf]
  %v1993 = vld [vmem:[%s5 + $0x18] sm:$0xf]
  %v1994 = vld [vmem:[%s5 + $0x1c] sm:$0xf]
  %v1995 = vld [vmem:[%s5 + $0x20] sm:$0xf]
  %v1996 = vld [vmem:[%s5 + $0x24] sm:$0xf]
  %v1997 = vld [vmem:[%s5 + $0x28] sm:$0xf]
  %v1998 = vld [vmem:[%s5 + $0x2c] sm:$0xf]
  %v1999 = vld [vmem:[%s5 + $0x30] sm:$0xf]
  %v2000 = vld [vmem:[%s5 + $0x34] sm:$0xf]
  %v2001 = vld [vmem:[%s5 + $0x38] sm:$0xf]
  %v2002 = vld [vmem:[%s5 + $0x3c] sm:$0xf]
  %v2003 = vld [vmem:[%s5 + $0x40] sm:$0xf]
  %v2004 = vld [vmem:[%s5 + $0x44] sm:$0xf]
  %v2005 = vld [vmem:[%s5 + $0x48] sm:$0xf]
  %v2006 = vld [vmem:[%s5 + $0x4c] sm:$0xf]
  %v2007 = vld [vmem:[%s5 + $0x50] sm:$0xf]
  %v2008 = vld [vmem:[%s5 + $0x54] sm:$0xf]
  %v2009 = vld [vmem:[%s5 + $0x58] sm:$0xf]
  %v2010 = vld [vmem:[%s5 + $0x5c] sm:$0xf]
  %v2011 = vld [vmem:[%s5 + $0x60] sm:$0xf]
  %v2012 = vld [vmem:[%s5 + $0x64] sm:$0xf]
  %v2013 = vld [vmem:[%s5 + $0x68] sm:$0xf]
  %v2014 = vld [vmem:[%s5 + $0x6c] sm:$0xf]
  %v2015 = vld [vmem:[%s5 + $0x70] sm:$0xf]
  %v2016 = vld [vmem:[%s5 + $0x74] sm:$0xf]
  %v2017 = vld [vmem:[%s5 + $0x78] sm:$0xf]
  %v2018 = vld [vmem:[%s5 + $0x7c] sm:$0xf]
  %v2019 = vld [vmem:[%s5 + $0x80] sm:$0xf]
  %v2020 = vld [vmem:[%s5 + $0x84] sm:$0xf]
  %v2021 = vld [vmem:[%s5 + $0x88] sm:$0xf]
  %v2022 = vld [vmem:[%s5 + $0x8c] sm:$0xf]
  %v2023 = vld [vmem:[%s5 + $0x90] sm:$0xf]
  %v2024 = vld [vmem:[%s5 + $0x94] sm:$0xf]
  %v2025 = vld [vmem:[%s5 + $0x98] sm:$0xf]
  %v2026 = vld [vmem:[%s5 + $0x9c] sm:$0xf]
  %v2027 = vld [vmem:[%s5 + $0xa0] sm:$0xf]
  %v2028 = vld [vmem:[%s5 + $0xa4] sm:$0xf]
  %v2029 = vld [vmem:[%s5 + $0xa8] sm:$0xf]
  %v2030 = vld [vmem:[%s5 + $0xac] sm:$0xf]
  %v2031 = vld [vmem:[%s5 + $0xb0] sm:$0xf]
  %v2032 = vld [vmem:[%s5 + $0xb4] sm:$0xf]
  %v2033 = vld [vmem:[%s5 + $0xb8] sm:$0xf]
  %v2034 = vld [vmem:[%s5 + $0xbc] sm:$0xf]
  %v2035 = vld [vmem:[%s5 + $0xc0] sm:$0xf]
  %v2036 = vld [vmem:[%s5 + $0xc4] sm:$0xf]
  %v2037 = vld [vmem:[%s5 + $0xc8] sm:$0xf]
  %v2038 = vld [vmem:[%s5 + $0xcc] sm:$0xf]
  %v2039 = vld [vmem:[%s5 + $0xd0] sm:$0xf]
  %v2040 = vld [vmem:[%s5 + $0xd4] sm:$0xf]
  %v2041 = vld [vmem:[%s5 + $0xd8] sm:$0xf]
  %v2042 = vld [vmem:[%s5 + $0xdc] sm:$0xf]
  %v2043 = vld [vmem:[%s5 + $0xe0] sm:$0xf]
  %v2044 = vld [vmem:[%s5 + $0xe4] sm:$0xf]
  %v2045 = vld [vmem:[%s5 + $0xe8] sm:$0xf]
  %v2046 = vld [vmem:[%s5 + $0xec] sm:$0xf]
  %v2047 = vld [vmem:[%s5 + $0xf0] sm:$0xf]
  %v2048 = vld [vmem:[%s5 + $0xf4] sm:$0xf]
  %v2049 = vld [vmem:[%s5 + $0xf8] sm:$0xf]
  %v2050 = vld [vmem:[%s5 + $0xfc] sm:$0xf]
  %v2051 = vld [vmem:[%s6] sm:$0x1]
  %v2053 = vlaneseq
  %v2054 = vshrl.u32 %v2053, 7
  %v2055 = vsub.s32 0, %v2054
  %v2056 = vrot.slane %v2051, %v2055
  %v2122 = vunpack.c.l.b16 %v1987
  %v2123 = vunpack.c.l.b16 %v1988
  %v2124 = vunpack.c.l.b16 %v1989
  %v2125 = vunpack.c.l.b16 %v1990
  %v2126 = vunpack.c.l.b16 %v1991
  %v2127 = vunpack.c.l.b16 %v1992
  %v2128 = vunpack.c.l.b16 %v1993
  %v2129 = vunpack.c.l.b16 %v1994
  %v2130 = vunpack.c.l.b16 %v1995
  %v2131 = vunpack.c.l.b16 %v1996
  %v2132 = vunpack.c.l.b16 %v1997
  %v2133 = vunpack.c.l.b16 %v1998
  %v2134 = vunpack.c.l.b16 %v1999
  %v2135 = vunpack.c.l.b16 %v2000
  %v2136 = vunpack.c.l.b16 %v2001
  %v2137 = vunpack.c.l.b16 %v2002
  %v2138 = vunpack.c.l.b16 %v2003
  %v2139 = vunpack.c.l.b16 %v2004
  %v2140 = vunpack.c.l.b16 %v2005
  %v2141 = vunpack.c.l.b16 %v2006
  %v2142 = vunpack.c.l.b16 %v2007
  %v2143 = vunpack.c.l.b16 %v2008
  %v2144 = vunpack.c.l.b16 %v2009
  %v2145 = vunpack.c.l.b16 %v2010
  %v2146 = vunpack.c.l.b16 %v2011
  %v2147 = vunpack.c.l.b16 %v2012
  %v2148 = vunpack.c.l.b16 %v2013
  %v2149 = vunpack.c.l.b16 %v2014
  %v2150 = vunpack.c.l.b16 %v2015
  %v2151 = vunpack.c.l.b16 %v2016
  %v2152 = vunpack.c.l.b16 %v2017
  %v2153 = vunpack.c.l.b16 %v2018
  %v2154 = vunpack.c.l.b16 %v2019
  %v2155 = vunpack.c.l.b16 %v2020
  %v2156 = vunpack.c.l.b16 %v2021
  %v2157 = vunpack.c.l.b16 %v2022
  %v2158 = vunpack.c.l.b16 %v2023
  %v2159 = vunpack.c.l.b16 %v2024
  %v2160 = vunpack.c.l.b16 %v2025
  %v2161 = vunpack.c.l.b16 %v2026
  %v2162 = vunpack.c.l.b16 %v2027
  %v2163 = vunpack.c.l.b16 %v2028
  %v2164 = vunpack.c.l.b16 %v2029
  %v2165 = vunpack.c.l.b16 %v2030
  %v2166 = vunpack.c.l.b16 %v2031
  %v2167 = vunpack.c.l.b16 %v2032
  %v2168 = vunpack.c.l.b16 %v2033
  %v2169 = vunpack.c.l.b16 %v2034
  %v2170 = vunpack.c.l.b16 %v2035
  %v2171 = vunpack.c.l.b16 %v2036
  %v2172 = vunpack.c.l.b16 %v2037
  %v2173 = vunpack.c.l.b16 %v2038
  %v2174 = vunpack.c.l.b16 %v2039
  %v2175 = vunpack.c.l.b16 %v2040
  %v2176 = vunpack.c.l.b16 %v2041
  %v2177 = vunpack.c.l.b16 %v2042
  %v2178 = vunpack.c.l.b16 %v2043
  %v2179 = vunpack.c.l.b16 %v2044
  %v2180 = vunpack.c.l.b16 %v2045
  %v2181 = vunpack.c.l.b16 %v2046
  %v2182 = vunpack.c.l.b16 %v2047
  %v2183 = vunpack.c.l.b16 %v2048
  %v2184 = vunpack.c.l.b16 %v2049
  %v2185 = vunpack.c.l.b16 %v2050
  %v2186 = vpack.c.b16 %v2123, %v2122
  %v2187 = vpack.c.b16 %v2125, %v2124
  %v2188 = vpack.c.b16 %v2127, %v2126
  %v2189 = vpack.c.b16 %v2129, %v2128
  %v2190 = vpack.c.b16 %v2131, %v2130
  %v2191 = vpack.c.b16 %v2133, %v2132
  %v2192 = vpack.c.b16 %v2135, %v2134
  %v2193 = vpack.c.b16 %v2137, %v2136
  %v2194 = vpack.c.b16 %v2139, %v2138
  %v2195 = vpack.c.b16 %v2141, %v2140
  %v2196 = vpack.c.b16 %v2143, %v2142
  %v2197 = vpack.c.b16 %v2145, %v2144
  %v2198 = vpack.c.b16 %v2147, %v2146
  %v2199 = vpack.c.b16 %v2149, %v2148
  %v2200 = vpack.c.b16 %v2151, %v2150
  %v2201 = vpack.c.b16 %v2153, %v2152
  %v2202 = vpack.c.b16 %v2155, %v2154
  %v2203 = vpack.c.b16 %v2157, %v2156
  %v2204 = vpack.c.b16 %v2159, %v2158
  %v2205 = vpack.c.b16 %v2161, %v2160
  %v2206 = vpack.c.b16 %v2163, %v2162
  %v2207 = vpack.c.b16 %v2165, %v2164
  %v2208 = vpack.c.b16 %v2167, %v2166
  %v2209 = vpack.c.b16 %v2169, %v2168
  %v2210 = vpack.c.b16 %v2171, %v2170
  %v2211 = vpack.c.b16 %v2173, %v2172
  %v2212 = vpack.c.b16 %v2175, %v2174
  %v2213 = vpack.c.b16 %v2177, %v2176
  %v2214 = vpack.c.b16 %v2179, %v2178
  %v2215 = vpack.c.b16 %v2181, %v2180
  %v2216 = vpack.c.b16 %v2183, %v2182
  %v2217 = vpack.c.b16 %v2185, %v2184
  %2250 = vmatprep.subr.bf16.mxu0 0
  %2251 = vmatpush1.bf16.msra.mxu0 %v2186
  %2252 = vmatprep.subr.bf16.mxu0 0
  %2253 = vmatpush1.bf16.msra.mxu0 %v2187
  %2254 = vmatprep.subr.bf16.mxu0 0
  %2255 = vmatpush1.bf16.msra.mxu0 %v2188
  %2256 = vmatprep.subr.bf16.mxu0 0
  %2257 = vmatpush1.bf16.msra.mxu0 %v2189
  %2258 = vmatprep.subr.bf16.mxu0 0
  %2259 = vmatpush1.bf16.msra.mxu0 %v2190
  %2260 = vmatprep.subr.bf16.mxu0 0
  %2261 = vmatpush1.bf16.msra.mxu0 %v2191
  %2262 = vmatprep.subr.bf16.mxu0 0
  %2263 = vmatpush1.bf16.msra.mxu0 %v2192
  %2264 = vmatprep.subr.bf16.mxu0 0
  %2265 = vmatpush1.bf16.msra.mxu0 %v2193
  %2266 = vmatprep.subr.bf16.mxu0 0
  %2267 = vmatpush1.bf16.msra.mxu0 %v2194
  %2268 = vmatprep.subr.bf16.mxu0 0
  %2269 = vmatpush1.bf16.msra.mxu0 %v2195
  %2270 = vmatprep.subr.bf16.mxu0 0
  %2271 = vmatpush1.bf16.msra.mxu0 %v2196
  %2272 = vmatprep.subr.bf16.mxu0 0
  %2273 = vmatpush1.bf16.msra.mxu0 %v2197
  %2274 = vmatprep.subr.bf16.mxu0 0
  %2275 = vmatpush1.bf16.msra.mxu0 %v2198
  %2276 = vmatprep.subr.bf16.mxu0 0
  %2277 = vmatpush1.bf16.msra.mxu0 %v2199
  %2278 = vmatprep.subr.bf16.mxu0 0
  %2279 = vmatpush1.bf16.msra.mxu0 %v2200
  %2280 = vmatprep.subr.bf16.mxu0 0
  %2281 = vmatpush1.bf16.msra.mxu0 %v2201
  %2282 = vmatprep.mubr.bf16.mxu0 %v1970
  %2283 = vmatmul.mubr.bf16.gmra.mrb[0].mxu0 %v1962
  %v2284 = vpop.f32.mrb[0].mxu0
  %v2285 = vadd.f32 %v2056, %v2284
  %v2286 = vpop.f32.mrb[0].mxu0
  %v2287 = vpop.f32.mrb[0].mxu0
  %v2288 = vadd.f32 %v2056, %v2287
  %v2289 = vpop.f32.mrb[0].mxu0
  %2290 = vdwg.mxu0
  %2291 = vmatprep.subr.bf16.mxu0 0
  %2292 = vmatpush1.bf16.msra.mxu0 %v2202
  %2293 = vmatprep.subr.bf16.mxu0 0
  %2294 = vmatpush1.bf16.msra.mxu0 %v2203
  %2295 = vmatprep.subr.bf16.mxu0 0
  %2296 = vmatpush1.bf16.msra.mxu0 %v2204
  %2297 = vmatprep.subr.bf16.mxu0 0
  %2298 = vmatpush1.bf16.msra.mxu0 %v2205
  %2299 = vmatprep.subr.bf16.mxu0 0
  %2300 = vmatpush1.bf16.msra.mxu0 %v2206
  %2301 = vmatprep.subr.bf16.mxu0 0
  %2302 = vmatpush1.bf16.msra.mxu0 %v2207
  %2303 = vmatprep.subr.bf16.mxu0 0
  %2304 = vmatpush1.bf16.msra.mxu0 %v2208
  %2305 = vmatprep.subr.bf16.mxu0 0
  %2306 = vmatpush1.bf16.msra.mxu0 %v2209
  %2307 = vmatprep.subr.bf16.mxu0 0
  %2308 = vmatpush1.bf16.msra.mxu0 %v2210
  %2309 = vmatprep.subr.bf16.mxu0 0
  %2310 = vmatpush1.bf16.msra.mxu0 %v2211
  %2311 = vmatprep.subr.bf16.mxu0 0
  %2312 = vmatpush1.bf16.msra.mxu0 %v2212
  %2313 = vmatprep.subr.bf16.mxu0 0
  %2314 = vmatpush1.bf16.msra.mxu0 %v2213
  %2315 = vmatprep.subr.bf16.mxu0 0
  %2316 = vmatpush1.bf16.msra.mxu0 %v2214
  %2317 = vmatprep.subr.bf16.mxu0 0
  %2318 = vmatpush1.bf16.msra.mxu0 %v2215
  %2319 = vmatprep.subr.bf16.mxu0 0
  %2320 = vmatpush1.bf16.msra.mxu0 %v2216
  %2321 = vmatprep.subr.bf16.mxu0 0
  %2322 = vmatpush1.bf16.msra.mxu0 %v2217
  %2323 = vmatprep.mubr.bf16.mxu0 %v1986
  %2324 = vmatmul.mubr.bf16.gmra.mrb[0].mxu0 %v1978
  %v2325 = vpop.f32.mrb[0].mxu0
  %v2326 = vadd.f32 %v2285, %v2325
  %v2327 = vpop.f32.mrb[0].mxu0
  %v2328 = vpop.f32.mrb[0].mxu0
  %v2329 = vadd.f32 %v2288, %v2328
  %v2330 = vpop.f32.mrb[0].mxu0
  %2331 = vdwg.mxu0
  %v2332 = vmax.f32 %v2326, 0.0
  %v2333 = vmax.f32 %v2329, 0.0
  %v2334 = vpack.c.bf16 %v2333, %v2332
  %v2335 = vld [vmem:[%s7] sm:$0xf]
  %v2336 = vld [vmem:[%s7 + $0x4] sm:$0xf]
  %v2337 = vld [vmem:[%s7 + $0x8] sm:$0xf]
  %v2338 = vld [vmem:[%s7 + $0xc] sm:$0xf]
  %v2339 = vld [vmem:[%s7 + $0x10] sm:$0xf]
  %v2340 = vld [vmem:[%s7 + $0x14] sm:$0xf]
  %v2341 = vld [vmem:[%s7 + $0x18] sm:$0xf]
  %v2342 = vld [vmem:[%s7 + $0x1c] sm:$0xf]
  %v2343 = vld [vmem:[%s7 + $0x20] sm:$0xf]
  %v2344 = vld [vmem:[%s7 + $0x24] sm:$0xf]
  %v2345 = vld [vmem:[%s7 + $0x28] sm:$0xf]
  %v2346 = vld [vmem:[%s7 + $0x2c] sm:$0xf]
  %v2347 = vld [vmem:[%s7 + $0x30] sm:$0xf]
  %v2348 = vld [vmem:[%s7 + $0x34] sm:$0xf]
  %v2349 = vld [vmem:[%s7 + $0x38] sm:$0xf]
  %v2350 = vld [vmem:[%s7 + $0x3c] sm:$0xf]
  %v2351 = vld [vmem:[%s8] sm:$0x1]
  %v2353 = vlaneseq
  %v2354 = vshrl.u32 %v2353, 7
  %v2355 = vsub.s32 0, %v2354
  %v2356 = vrot.slane %v2351, %v2355
  %v2374 = vunpack.c.l.b16 %v2335
  %v2375 = vunpack.c.l.b16 %v2336
  %v2376 = vunpack.c.l.b16 %v2337
  %v2377 = vunpack.c.l.b16 %v2338
  %v2378 = vunpack.c.l.b16 %v2339
  %v2379 = vunpack.c.l.b16 %v2340
  %v2380 = vunpack.c.l.b16 %v2341
  %v2381 = vunpack.c.l.b16 %v2342
  %v2382 = vunpack.c.l.b16 %v2343
  %v2383 = vunpack.c.l.b16 %v2344
  %v2384 = vunpack.c.l.b16 %v2345
  %v2385 = vunpack.c.l.b16 %v2346
  %v2386 = vunpack.c.l.b16 %v2347
  %v2387 = vunpack.c.l.b16 %v2348
  %v2388 = vunpack.c.l.b16 %v2349
  %v2389 = vunpack.c.l.b16 %v2350
  %v2390 = vpack.c.b16 %v2375, %v2374
  %v2391 = vpack.c.b16 %v2377, %v2376
  %v2392 = vpack.c.b16 %v2379, %v2378
  %v2393 = vpack.c.b16 %v2381, %v2380
  %v2394 = vpack.c.b16 %v2383, %v2382
  %v2395 = vpack.c.b16 %v2385, %v2384
  %v2396 = vpack.c.b16 %v2387, %v2386
  %v2397 = vpack.c.b16 %v2389, %v2388
  %2406 = vmatprep.subr.bf16.mxu0 0
  %2407 = vmatpush1.bf16.msra.mxu0 %v2390
  %2408 = vmatprep.subr.bf16.mxu0 0
  %2409 = vmatpush1.bf16.msra.mxu0 %v2391
  %2410 = vmatprep.subr.bf16.mxu0 0
  %2411 = vmatpush1.bf16.msra.mxu0 %v2392
  %2412 = vmatprep.subr.bf16.mxu0 0
  %2413 = vmatpush1.bf16.msra.mxu0 %v2393
  %2414 = vmatprep.subr.bf16.mxu0 0
  %2415 = vmatpush1.bf16.msra.mxu0 %v2394
  %2416 = vmatprep.subr.bf16.mxu0 0
  %2417 = vmatpush1.bf16.msra.mxu0 %v2395
  %2418 = vmatprep.subr.bf16.mxu0 0
  %2419 = vmatpush1.bf16.msra.mxu0 %v2396
  %2420 = vmatprep.subr.bf16.mxu0 0
  %2421 = vmatpush1.bf16.msra.mxu0 %v2397
  %2422 = vmatprep.subr.bf16.mxu0 0
  %2423 = vmatpush1.bf16.msra.mxu0 0
  %2424 = vmatprep.subr.bf16.mxu0 0
  %2425 = vmatpush1.bf16.msra.mxu0 0
  %2426 = vmatprep.subr.bf16.mxu0 0
  %2427 = vmatpush1.bf16.msra.mxu0 0
  %2428 = vmatprep.subr.bf16.mxu0 0
  %2429 = vmatpush1.bf16.msra.mxu0 0
  %2430 = vmatprep.subr.bf16.mxu0 0
  %2431 = vmatpush1.bf16.msra.mxu0 0
  %2432 = vmatprep.subr.bf16.mxu0 0
  %2433 = vmatpush1.bf16.msra.mxu0 0
  %2434 = vmatprep.subr.bf16.mxu0 0
  %2435 = vmatpush1.bf16.msra.mxu0 0
  %2436 = vmatprep.subr.bf16.mxu0 0
  %2437 = vmatpush1.bf16.msra.mxu0 0
  %2438 = vmatprep.mubr.bf16.mxu0 0
  %2439 = vmatmul.mubr.bf16.gmra.mrb[0].mxu0 %v2334
  %v2440 = vpop.f32.mrb[0].mxu0
  %v2441 = vadd.f32 %v2356, %v2440
  %v2442 = vpop.f32.mrb[0].mxu0
  %v2443 = vpop.f32.mrb[0].mxu0
  %v2444 = vadd.f32 %v2356, %v2443
  %v2445 = vpop.f32.mrb[0].mxu0
  %2446 = vdwg.mxu0
  %2447 = vst [vmem:[%s9] sm:$0xff] %v2441
  %2448 = vst [vmem:[%s9 + $0x8] sm:$0xff] %v2444
  // Predicated region
  $region38: #{forward.1} parent=0 // pred_check
    _
  $region39: #{forward.1} parent=0 // pred_check_branch
    %2450 = sbr.rel (0) target = $region41
  $region40: #{forward.1} parent=0 // pred_region
    _
  $region41: #{forward.1} parent=0 // pred_fallthru
    _
  // Predicated region
  $region42: #{forward.1} parent=0 // pred_check
    _
  $region43: #{forward.1} parent=0 // pred_check_branch
    %2452 = sbr.rel (0) target = $region45
  $region44: #{forward.1} parent=0 // pred_region
    _
  $region45: #{forward.1} parent=0 // pred_fallthru
    _

</llo_original>
